<compile_context>
chip_gen: v7x
topology: tpu7x:2x2x1
jax: 0.10.0
libtpu: 0.0.40
codegen_flags: <defaults>
</compile_context>

<pallas_src>
import jax
import jax.numpy as jnp
from jax.experimental import pallas as pl
from jax.experimental.pallas import tpu as pltpu


def _round_up(x, m):
    return (x + m - 1) // m * m


def _choose_batch_tile(B):
    """Rows-per-branch handled per grid step (each step touches 2*TB rows)."""
    if B < 128:
        return B                                  # one step, full-extent block, no pad
    steps = max(2, min(8, pl.cdiv(B, 256)))       # >=2 steps (megacore), <=8 steps
    tb = pl.cdiv(B, steps)
    if tb >= 256:
        align = 256                               # full-width MXU passes in M (v6e/v7x)
    elif tb >= 128:
        align = 128
    else:
        align = 64
    return min(1024, _round_up(tb, align))        # 1024/branch = 2048 fused rows/step


def siamese_embed_kernel(x1_ref, x2_ref, w1_ref, b1_ref, w2_ref, b2_ref,
                         o1_ref, o2_ref):
    """One grid step: shared embedding net applied to a tile of x1 AND x2.

        embed(x) = relu(x @ W1 + b1) @ W2 + b2

    MXU matmuls use bf16 operands with f32 accumulation; bias add / ReLU stay
    in f32 (no bf16 VPU path on v5e).  Both branches reuse the same
    VMEM-resident W1/W2/b1/b2 refs (shared weights).
    """
    def embed(x_ref, o_ref):
        x = x_ref[...].astype(jnp.bfloat16)                  # f32 HBM read, bf16 in VMEM
        h = jnp.dot(x, w1_ref[...], preferred_element_type=jnp.float32)
        h = jnp.maximum(h + b1_ref[...], 0.0)                # f32 bias + ReLU (VPU)
        e = jnp.dot(h.astype(jnp.bfloat16), w2_ref[...],
                    preferred_element_type=jnp.float32)
        o_ref[...] = (e + b2_ref[...]).astype(o_ref.dtype)

    embed(x1_ref, o1_ref)
    embed(x2_ref, o2_ref)


def siamese_forward(x1, x2, w1, b1, w2, b2):
    """x1, x2: (B, C, H, W) float32 NCHW.  w1/w2 expected in bf16 (cast once
    outside this jitted function).  Returns (embed1, embed2), each (B, E) f32."""
    B = x1.shape[0]
    D, H = w1.shape
    E = w2.shape[1]

    # Free row-major flatten, identical to torch .view(B, -1). Keep f32: one
    # f32 HBM read by the kernel beats a wrapper-side bf16 convert.
    x1f = x1.reshape(B, D)
    x2f = x2.reshape(B, D)

    # These are no-ops when the caller already passes bf16 weights / f32 biases.
    w1b = w1.astype(jnp.bfloat16)
    w2b = w2.astype(jnp.bfloat16)
    b1r = b1.reshape(1, H).astype(jnp.float32)
    b2r = b2.reshape(1, E).astype(jnp.float32)

    TB = _choose_batch_tile(B)
    Bp = _round_up(B, TB)
    if Bp != B:
        pad = ((0, Bp - B), (0, 0))
        x1f = jnp.pad(x1f, pad)
        x2f = jnp.pad(x2f, pad)
    grid = (Bp // TB,)

    # VMEM budget from the real working set:
    est = (
        2 * 2 * TB * D * 4            # x1/x2 f32 tiles, double-buffered
        + 2 * 2 * TB * E * 4          # o1/o2 f32 tiles, double-buffered
        + 2 * (D * H + H * E) * 2     # W1/W2 bf16 (double-buffer worst case)
        + 2 * (H + E) * 4             # biases
        + 2 * TB * D * 2              # in-kernel bf16 copies of the x tiles
        + 2 * TB * H * (4 + 2)        # hidden h (f32) + bf16 copy, both branches
        + 2 * TB * E * 4              # pre-store f32 embeddings
    )
    vmem_limit = int(min(64 << 20, max(4 << 20, int(1.5 * est) + (2 << 20))))

    out1, out2 = pl.pallas_call(
        siamese_embed_kernel,
        out_shape=(jax.ShapeDtypeStruct((Bp, E), jnp.float32),
                   jax.ShapeDtypeStruct((Bp, E), jnp.float32)),
        grid=grid,
        in_specs=[
            pl.BlockSpec((TB, D), lambda i: (i, 0)),   # x1: tiled over batch
            pl.BlockSpec((TB, D), lambda i: (i, 0)),   # x2: tiled over batch
            pl.BlockSpec((D, H), lambda i: (0, 0)),    # W1: VMEM-resident (shared)
            pl.BlockSpec((1, H), lambda i: (0, 0)),    # b1
            pl.BlockSpec((H, E), lambda i: (0, 0)),    # W2: VMEM-resident (shared)
            pl.BlockSpec((1, E), lambda i: (0, 0)),    # b2
        ],
        out_specs=(pl.BlockSpec((TB, E), lambda i: (i, 0)),
                   pl.BlockSpec((TB, E), lambda i: (i, 0))),
        compiler_params=pltpu.CompilerParams(
            dimension_semantics=("parallel",),   # shard batch grid across TCs (v7x)
            vmem_limit_bytes=vmem_limit,
        ),
    )(x1f, x2f, w1b, b1r, w2b, b2r)

    return out1[:B], out2[:B]


if __name__ == "__main__":
    # Small shapes consistent with an image Siamese net.
    B, C, Himg, Wimg = 2, 4, 16, 16
    D = C * Himg * Wimg          # 1024
    Hdim = 256                   # hidden width of embedding net
    E = 128                      # embedding dim

    key = jax.random.PRNGKey(0)
    k1, k2, k3, k4, k5, k6 = jax.random.split(key, 6)

    # Deterministic parameter init (synthetic, not a checkpoint).
    w1 = jax.random.normal(k1, (D, Hdim), jnp.float32) * (1.0 / jnp.sqrt(D))
    b1 = jax.random.normal(k2, (Hdim,), jnp.float32) * 0.01
    w2 = jax.random.normal(k3, (Hdim, E), jnp.float32) * (1.0 / jnp.sqrt(Hdim))
    b2 = jax.random.normal(k4, (E,), jnp.float32) * 0.01

    x1 = jax.random.normal(k5, (B, C, Himg, Wimg), jnp.float32)
    x2 = jax.random.normal(k6, (B, C, Himg, Wimg), jnp.float32)

    # Cast the shared weights to bf16 ONCE, outside the jitted forward, so no
    # per-call convert op is launched (perf review item #1).
    w1b = jnp.asarray(w1, jnp.bfloat16)
    w2b = jnp.asarray(w2, jnp.bfloat16)

    fwd = jax.jit(siamese_forward)
    e1, e2 = fwd(x1, x2, w1b, b1, w2b, b2)
    jax.block_until_ready((e1, e2))

    # Reference check in plain JAX (f32 math; kernel uses bf16 MXU operands,
    # so use a tolerance consistent with bf16 rounding).
    def ref_embed(x):
        h = jnp.maximum(x.reshape(B, D) @ w1 + b1, 0.0)
        return h @ w2 + b2

    r1, r2 = ref_embed(x1), ref_embed(x2)
    assert e1.shape == (B, E) and e2.shape == (B, E)
    assert jnp.allclose(e1, r1, atol=5e-2, rtol=5e-2)
    assert jnp.allclose(e2, r2, atol=5e-2, rtol=5e-2)

    print("KERNEL_OK")
</pallas_src>

<mosaic_0001>
module attributes {stable_mosaic.version = 11 : i64} {
  func.func @siamese_embed_kernel(%arg0: i32, %arg1: memref<2x1024xf32, #tpu.memory_space<vmem>>, %arg2: memref<2x1024xf32, #tpu.memory_space<vmem>>, %arg3: memref<1024x256xbf16, #tpu.memory_space<vmem>>, %arg4: memref<1x256xf32, #tpu.memory_space<vmem>>, %arg5: memref<256x128xbf16, #tpu.memory_space<vmem>>, %arg6: memref<1x128xf32, #tpu.memory_space<vmem>>, %arg7: memref<2x128xf32, #tpu.memory_space<vmem>>, %arg8: memref<2x128xf32, #tpu.memory_space<vmem>>) attributes {dimension_semantics = [#tpu.dimension_semantics<parallel>], iteration_bounds = array<i64: 1>, scalar_prefetch = 0 : i64, scratch_operands = 0 : i64, tpu.core_type = #tpu.core_type<tc>, window_params = [{transform_indices = @transform_0, window_bounds = array<i64: 2, 1024>}, {transform_indices = @transform_1, window_bounds = array<i64: 2, 1024>}, {pipeline_mode = #tpu.pipeline_mode<synchronous>, transform_indices = @transform_2, window_bounds = array<i64: 1024, 256>}, {pipeline_mode = #tpu.pipeline_mode<synchronous>, transform_indices = @transform_3, window_bounds = array<i64: 1, 256>}, {pipeline_mode = #tpu.pipeline_mode<synchronous>, transform_indices = @transform_4, window_bounds = array<i64: 256, 128>}, {pipeline_mode = #tpu.pipeline_mode<synchronous>, transform_indices = @transform_5, window_bounds = array<i64: 1, 128>}, {transform_indices = @transform_6, window_bounds = array<i64: 2, 128>}, {transform_indices = @transform_7, window_bounds = array<i64: 2, 128>}]} {
    %c0 = arith.constant 0 : index
    %c0_0 = arith.constant 0 : index
    %0 = vector.load %arg1[%c0, %c0_0] : memref<2x1024xf32, #tpu.memory_space<vmem>>, vector<2x1024xf32>
    %1 = arith.truncf %0 : vector<2x1024xf32> to vector<2x1024xbf16>
    %c0_1 = arith.constant 0 : index
    %c0_2 = arith.constant 0 : index
    %2 = vector.load %arg3[%c0_1, %c0_2] : memref<1024x256xbf16, #tpu.memory_space<vmem>>, vector<1024x256xbf16>
    %cst = arith.constant dense<0.000000e+00> : vector<2x256xf32>
    %3 = tpu.matmul %1, %2, %cst {dimension_numbers = #tpu.dot_dimension_numbers<[1], [0], [0], [1], [0, 0, 1, 1], [], []>} : vector<2x1024xbf16>, vector<1024x256xbf16>, vector<2x256xf32> -> vector<2x256xf32>
    %c0_3 = arith.constant 0 : index
    %c0_4 = arith.constant 0 : index
    %4 = vector.load %arg4[%c0_3, %c0_4] : memref<1x256xf32, #tpu.memory_space<vmem>>, vector<1x256xf32>
    %5 = vector.broadcast %4 : vector<1x256xf32> to vector<2x256xf32>
    %6 = arith.addf %3, %5 : vector<2x256xf32>
    %cst_5 = arith.constant 0.000000e+00 : f32
    %7 = vector.broadcast %cst_5 : f32 to vector<2x256xf32>
    %8 = arith.maximumf %6, %7 : vector<2x256xf32>
    %9 = arith.truncf %8 : vector<2x256xf32> to vector<2x256xbf16>
    %c0_6 = arith.constant 0 : index
    %c0_7 = arith.constant 0 : index
    %10 = vector.load %arg5[%c0_6, %c0_7] : memref<256x128xbf16, #tpu.memory_space<vmem>>, vector<256x128xbf16>
    %cst_8 = arith.constant dense<0.000000e+00> : vector<2x128xf32>
    %11 = tpu.matmul %9, %10, %cst_8 {dimension_numbers = #tpu.dot_dimension_numbers<[1], [0], [0], [1], [0, 0, 1, 1], [], []>} : vector<2x256xbf16>, vector<256x128xbf16>, vector<2x128xf32> -> vector<2x128xf32>
    %c0_9 = arith.constant 0 : index
    %c0_10 = arith.constant 0 : index
    %12 = vector.load %arg6[%c0_9, %c0_10] : memref<1x128xf32, #tpu.memory_space<vmem>>, vector<1x128xf32>
    %13 = vector.broadcast %12 : vector<1x128xf32> to vector<2x128xf32>
    %14 = arith.addf %11, %13 : vector<2x128xf32>
    %c0_11 = arith.constant 0 : index
    %c0_12 = arith.constant 0 : index
    %15 = vector.load %arg7[%c0_11, %c0_12] : memref<2x128xf32, #tpu.memory_space<vmem>>, vector<2x128xf32>
    tpu.vector_store %arg7[%c0_11, %c0_12], %14 {strides = array<i32>} : memref<2x128xf32, #tpu.memory_space<vmem>>, vector<2x128xf32>,
    %c0_13 = arith.constant 0 : index
    %c0_14 = arith.constant 0 : index
    %16 = vector.load %arg2[%c0_13, %c0_14] : memref<2x1024xf32, #tpu.memory_space<vmem>>, vector<2x1024xf32>
    %17 = arith.truncf %16 : vector<2x1024xf32> to vector<2x1024xbf16>
    %c0_15 = arith.constant 0 : index
    %c0_16 = arith.constant 0 : index
    %18 = vector.load %arg3[%c0_15, %c0_16] : memref<1024x256xbf16, #tpu.memory_space<vmem>>, vector<1024x256xbf16>
    %cst_17 = arith.constant dense<0.000000e+00> : vector<2x256xf32>
    %19 = tpu.matmul %17, %18, %cst_17 {dimension_numbers = #tpu.dot_dimension_numbers<[1], [0], [0], [1], [0, 0, 1, 1], [], []>} : vector<2x1024xbf16>, vector<1024x256xbf16>, vector<2x256xf32> -> vector<2x256xf32>
    %c0_18 = arith.constant 0 : index
    %c0_19 = arith.constant 0 : index
    %20 = vector.load %arg4[%c0_18, %c0_19] : memref<1x256xf32, #tpu.memory_space<vmem>>, vector<1x256xf32>
    %21 = vector.broadcast %20 : vector<1x256xf32> to vector<2x256xf32>
    %22 = arith.addf %19, %21 : vector<2x256xf32>
    %cst_20 = arith.constant 0.000000e+00 : f32
    %23 = vector.broadcast %cst_20 : f32 to vector<2x256xf32>
    %24 = arith.maximumf %22, %23 : vector<2x256xf32>
    %25 = arith.truncf %24 : vector<2x256xf32> to vector<2x256xbf16>
    %c0_21 = arith.constant 0 : index
    %c0_22 = arith.constant 0 : index
    %26 = vector.load %arg5[%c0_21, %c0_22] : memref<256x128xbf16, #tpu.memory_space<vmem>>, vector<256x128xbf16>
    %cst_23 = arith.constant dense<0.000000e+00> : vector<2x128xf32>
    %27 = tpu.matmul %25, %26, %cst_23 {dimension_numbers = #tpu.dot_dimension_numbers<[1], [0], [0], [1], [0, 0, 1, 1], [], []>} : vector<2x256xbf16>, vector<256x128xbf16>, vector<2x128xf32> -> vector<2x128xf32>
    %c0_24 = arith.constant 0 : index
    %c0_25 = arith.constant 0 : index
    %28 = vector.load %arg6[%c0_24, %c0_25] : memref<1x128xf32, #tpu.memory_space<vmem>>, vector<1x128xf32>
    %29 = vector.broadcast %28 : vector<1x128xf32> to vector<2x128xf32>
    %30 = arith.addf %27, %29 : vector<2x128xf32>
    %c0_26 = arith.constant 0 : index
    %c0_27 = arith.constant 0 : index
    %31 = vector.load %arg8[%c0_26, %c0_27] : memref<2x128xf32, #tpu.memory_space<vmem>>, vector<2x128xf32>
    tpu.vector_store %arg8[%c0_26, %c0_27], %30 {strides = array<i32>} : memref<2x128xf32, #tpu.memory_space<vmem>>, vector<2x128xf32>,
    return
  }
  func.func @transform_0(%arg0: i32) -> (i32, i32) {
    %c0_i32 = arith.constant 0 : i32
    %c0_i32_0 = arith.constant 0 : i32
    return %arg0, %c0_i32 : i32, i32
  }
  func.func @transform_1(%arg0: i32) -> (i32, i32) {
    %c0_i32 = arith.constant 0 : i32
    %c0_i32_0 = arith.constant 0 : i32
    return %arg0, %c0_i32 : i32, i32
  }
  func.func @transform_2(%arg0: i32) -> (i32, i32) {
    %c0_i32 = arith.constant 0 : i32
    %c0_i32_0 = arith.constant 0 : i32
    %c0_i32_1 = arith.constant 0 : i32
    return %c0_i32, %c0_i32_0 : i32, i32
  }
  func.func @transform_3(%arg0: i32) -> (i32, i32) {
    %c0_i32 = arith.constant 0 : i32
    %c0_i32_0 = arith.constant 0 : i32
    %c0_i32_1 = arith.constant 0 : i32
    return %c0_i32, %c0_i32_0 : i32, i32
  }
  func.func @transform_4(%arg0: i32) -> (i32, i32) {
    %c0_i32 = arith.constant 0 : i32
    %c0_i32_0 = arith.constant 0 : i32
    %c0_i32_1 = arith.constant 0 : i32
    return %c0_i32, %c0_i32_0 : i32, i32
  }
  func.func @transform_5(%arg0: i32) -> (i32, i32) {
    %c0_i32 = arith.constant 0 : i32
    %c0_i32_0 = arith.constant 0 : i32
    %c0_i32_1 = arith.constant 0 : i32
    return %c0_i32, %c0_i32_0 : i32, i32
  }
  func.func @transform_6(%arg0: i32) -> (i32, i32) {
    %c0_i32 = arith.constant 0 : i32
    %c0_i32_0 = arith.constant 0 : i32
    return %arg0, %c0_i32 : i32, i32
  }
  func.func @transform_7(%arg0: i32) -> (i32, i32) {
    %c0_i32 = arith.constant 0 : i32
    %c0_i32_0 = arith.constant 0 : i32
    return %arg0, %c0_i32 : i32, i32
  }
}

</mosaic_0001>

<llo_original>
// kernel: siamese_forward.1
$region0: #{siamese_forward.1}
  #allocation0 [shape = 'u32[]', space=smem, size = 0x4, offset = 0x4, fixed_abs, tag = 'smem constant byte address 0x4 - core index']
  #allocation1 [shape = 'u32[144,128]{1,0:T(1,128)}', space=vmem, size = 0x12000, scoped, tag = 'internal scratch']
  %s0 = inlined_call_operand.vmem [shape: f32[2,1024], index: 0, kind: input, shape index: {}]
  %s1 = inlined_call_operand.vmem [shape: f32[2,1024], index: 1, kind: input, shape index: {}]
  %s2 = inlined_call_operand.hbm [shape: bf16[1024,256], index: 2, kind: input, shape index: {}]
  %s3 = inlined_call_operand.vmem [shape: f32[1,256], index: 3, kind: input, shape index: {}]
  %s4 = inlined_call_operand.vmem [shape: bf16[256,128], index: 4, kind: input, shape index: {}]
  %s5 = inlined_call_operand.vmem [shape: f32[1,128], index: 5, kind: input, shape index: {}]
  %s6 = inlined_call_operand.hbm [shape: f32[2,128], index: 6, kind: output, shape index: {0}]
  %s7 = inlined_call_operand.hbm [shape: f32[2,128], index: 7, kind: output, shape index: {1}]
  %8 = xla_tuple %s6, %s7
  %s9 = sld [smem:[#allocation0]]
  $region46: #{siamese_forward.1} parent=0
    _
  %s11 = ssub.s32 1, %s9
  %s12 = scalar_select 0, %s11, %s9
  $region1: #{siamese_forward.1} parent=0
    #allocation2 [shape = 'u8[524288]{0}', space=vmem, size = 0x80000, scoped, tag = 'input window, operand 2, single buffered']
    #allocation3 [shape = 's32[1]{0}', space=sflag, size = 0x4, scoped, tag = 'scoped memory for siamese_forward.1']
    #allocation4 [shape = 's32[1]{0}', space=sflag, size = 0x4, scoped, tag = 'scoped memory for siamese_forward.1']
    #allocation5 [shape = 'u8[1024]{0}', space=vmem, size = 0x400, scoped, tag = 'output window, operand 0, single buffered']
    #allocation6 [shape = 'u8[1024]{0}', space=vmem, size = 0x400, scoped, tag = 'output window, operand 1, single buffered']
    #allocation7 [shape = 's32[1]{0}', space=sflag, size = 0x4, scoped, tag = 'scoped memory for siamese_forward.1']
    %13 = vsyncpa [#allocation3], 0
    %14 = vsyncpa [#allocation4], 0
    %15 = vsyncpa [#allocation7], 0
    // Predicated region
    $region2: #{siamese_forward.1} parent=1 // pred_check
      _
    $region3: #{siamese_forward.1} parent=1 // pred_check_branch
      %17 = sbr.rel (0) target = $region5
    $region4: #{siamese_forward.1} parent=1 // pred_region
      _
    $region5: #{siamese_forward.1} parent=1 // pred_fallthru
      _
    // Predicated region
    $region6: #{siamese_forward.1} parent=1 // pred_check
      _
    $region7: #{siamese_forward.1} parent=1 // pred_check_branch
      %19 = sbr.rel (0) target = $region9
    $region8: #{siamese_forward.1} parent=1 // pred_region
      _
    $region9: #{siamese_forward.1} parent=1 // pred_fallthru
      _
    // Predicated region
    $region10: #{siamese_forward.1} parent=1 // pred_check
      _
    $region11: #{siamese_forward.1} parent=1 // pred_check_branch
      %21 = sbr.rel (0) target = $region13
    $region12: #{siamese_forward.1} parent=1 // pred_region
      %s23 = ssub.s32 16384, 16384
      %24 = vsyncadd [#allocation3], %s23
      %s25 = sshll.u32 [#allocation2], 4
      %s26 = int_to_ptr.vmem [resolvable:$true] %s25
      %31 = dma.hbm_to_vmem [thread:$0]  %s2, 16384, %s26, [#allocation3], 128, 128, 8
    $region13: #{siamese_forward.1} parent=1 // pred_fallthru
      _
    // Predicated region
    $region14: #{siamese_forward.1} parent=1 // pred_check
      _
    $region15: #{siamese_forward.1} parent=1 // pred_check_branch
      %33 = sbr.rel (0) target = $region17
    $region16: #{siamese_forward.1} parent=1 // pred_region
      _
    $region17: #{siamese_forward.1} parent=1 // pred_fallthru
      _
    // Predicated region
    $region18: #{siamese_forward.1} parent=1 // pred_check
      _
    $region19: #{siamese_forward.1} parent=1 // pred_check_branch
      %35 = sbr.rel (0) target = $region21
    $region20: #{siamese_forward.1} parent=1 // pred_region
      _
    $region21: #{siamese_forward.1} parent=1 // pred_fallthru
      _
    // Predicated region
    $region22: #{siamese_forward.1} parent=1 // pred_check
      _
    $region23: #{siamese_forward.1} parent=1 // pred_check_branch
      %37 = sbr.rel (0) target = $region25
    $region24: #{siamese_forward.1} parent=1 // pred_region
      _
    $region25: #{siamese_forward.1} parent=1 // pred_fallthru
      _
    // Predicated region
    $region26: #{siamese_forward.1} parent=1 // pred_check
      _
    $region27: #{siamese_forward.1} parent=1 // pred_check_branch
      %39 = sbr.rel (0) target = $region29
    $region28: #{siamese_forward.1} parent=1 // pred_region
      %40 = dma.done [#allocation3], 16384
    $region29: #{siamese_forward.1} parent=1 // pred_fallthru
      _
    %v42 = vld [vmem:[%s0] sm:$0xff]
    %v43 = vld [vmem:[%s0 + $0x8] sm:$0xff]
    %v46 = vcombine.high %v42, %v42
    %v48 = vunpack.c.l.s4 1983009808
    %v49 = vunpack.c.0.s8 %v48
    %v50 = vlaneseq
    %v51 = vshrl.u32 %v50, 7
    %v52 = vsub.s32 %v49, %v51
    %v53 = vrot.slane %v42, %v52
    %v55 = vunpack.c.l.s4 1983009808
    %v56 = vunpack.c.0.s8 %v55
    %v57 = vlaneseq
    %v58 = vshrl.u32 %v57, 7
    %v59 = vsub.s32 %v56, %v58
    %v60 = vrot.slane %v46, %v59
    %v61 = vcombine.high %v53, %v53
    %v62 = vcombine.high %v60, %v60
    %v63 = vcombine.high %v43, %v43
    %v65 = vunpack.c.l.s4 1983009808
    %v66 = vunpack.c.0.s8 %v65
    %v67 = vlaneseq
    %v68 = vshrl.u32 %v67, 7
    %v69 = vsub.s32 %v66, %v68
    %v70 = vrot.slane %v43, %v69
    %v72 = vunpack.c.l.s4 1983009808
    %v73 = vunpack.c.0.s8 %v72
    %v74 = vlaneseq
    %v75 = vshrl.u32 %v74, 7
    %v76 = vsub.s32 %v73, %v75
    %v77 = vrot.slane %v63, %v76
    %v78 = vcombine.high %v70, %v70
    %v79 = vcombine.high %v77, %v77
    %v88 = vpack.c.bf16 %v53, %v53
    %v89 = vpack.c.bf16 %v61, %v61
    %v90 = vpack.c.bf16 %v60, %v60
    %v91 = vpack.c.bf16 %v62, %v62
    %v92 = vpack.c.bf16 %v70, %v70
    %v93 = vpack.c.bf16 %v78, %v78
    %v94 = vpack.c.bf16 %v77, %v77
    %v95 = vpack.c.bf16 %v79, %v79
    %v96 = vld [vmem:[#allocation2] sm:$0xff]
    %v97 = vld [vmem:[#allocation2 + $0x8] sm:$0xff]
    %v98 = vld [vmem:[#allocation2 + $0x10] sm:$0xff]
    %v99 = vld [vmem:[#allocation2 + $0x18] sm:$0xff]
    %v100 = vld [vmem:[#allocation2 + $0x20] sm:$0xff]
    %v101 = vld [vmem:[#allocation2 + $0x28] sm:$0xff]
    %v102 = vld [vmem:[#allocation2 + $0x30] sm:$0xff]
    %v103 = vld [vmem:[#allocation2 + $0x38] sm:$0xff]
    %v104 = vld [vmem:[#allocation2 + $0x40] sm:$0xff]
    %v105 = vld [vmem:[#allocation2 + $0x48] sm:$0xff]
    %v106 = vld [vmem:[#allocation2 + $0x50] sm:$0xff]
    %v107 = vld [vmem:[#allocation2 + $0x58] sm:$0xff]
    %v108 = vld [vmem:[#allocation2 + $0x60] sm:$0xff]
    %v109 = vld [vmem:[#allocation2 + $0x68] sm:$0xff]
    %v110 = vld [vmem:[#allocation2 + $0x70] sm:$0xff]
    %v111 = vld [vmem:[#allocation2 + $0x78] sm:$0xff]
    %v112 = vld [vmem:[#allocation2 + $0x80] sm:$0xff]
    %v113 = vld [vmem:[#allocation2 + $0x88] sm:$0xff]
    %v114 = vld [vmem:[#allocation2 + $0x90] sm:$0xff]
    %v115 = vld [vmem:[#allocation2 + $0x98] sm:$0xff]
    %v116 = vld [vmem:[#allocation2 + $0xa0] sm:$0xff]
    %v117 = vld [vmem:[#allocation2 + $0xa8] sm:$0xff]
    %v118 = vld [vmem:[#allocation2 + $0xb0] sm:$0xff]
    %v119 = vld [vmem:[#allocation2 + $0xb8] sm:$0xff]
    %v120 = vld [vmem:[#allocation2 + $0xc0] sm:$0xff]
    %v121 = vld [vmem:[#allocation2 + $0xc8] sm:$0xff]
    %v122 = vld [vmem:[#allocation2 + $0xd0] sm:$0xff]
    %v123 = vld [vmem:[#allocation2 + $0xd8] sm:$0xff]
    %v124 = vld [vmem:[#allocation2 + $0xe0] sm:$0xff]
    %v125 = vld [vmem:[#allocation2 + $0xe8] sm:$0xff]
    %v126 = vld [vmem:[#allocation2 + $0xf0] sm:$0xff]
    %v127 = vld [vmem:[#allocation2 + $0xf8] sm:$0xff]
    %v128 = vld [vmem:[#allocation2 + $0x100] sm:$0xff]
    %v129 = vld [vmem:[#allocation2 + $0x108] sm:$0xff]
    %v130 = vld [vmem:[#allocation2 + $0x110] sm:$0xff]
    %v131 = vld [vmem:[#allocation2 + $0x118] sm:$0xff]
    %v132 = vld [vmem:[#allocation2 + $0x120] sm:$0xff]
    %v133 = vld [vmem:[#allocation2 + $0x128] sm:$0xff]
    %v134 = vld [vmem:[#allocation2 + $0x130] sm:$0xff]
    %v135 = vld [vmem:[#allocation2 + $0x138] sm:$0xff]
    %v136 = vld [vmem:[#allocation2 + $0x140] sm:$0xff]
    %v137 = vld [vmem:[#allocation2 + $0x148] sm:$0xff]
    %v138 = vld [vmem:[#allocation2 + $0x150] sm:$0xff]
    %v139 = vld [vmem:[#allocation2 + $0x158] sm:$0xff]
    %v140 = vld [vmem:[#allocation2 + $0x160] sm:$0xff]
    %v141 = vld [vmem:[#allocation2 + $0x168] sm:$0xff]
    %v142 = vld [vmem:[#allocation2 + $0x170] sm:$0xff]
    %v143 = vld [vmem:[#allocation2 + $0x178] sm:$0xff]
    %v144 = vld [vmem:[#allocation2 + $0x180] sm:$0xff]
    %v145 = vld [vmem:[#allocation2 + $0x188] sm:$0xff]
    %v146 = vld [vmem:[#allocation2 + $0x190] sm:$0xff]
    %v147 = vld [vmem:[#allocation2 + $0x198] sm:$0xff]
    %v148 = vld [vmem:[#allocation2 + $0x1a0] sm:$0xff]
    %v149 = vld [vmem:[#allocation2 + $0x1a8] sm:$0xff]
    %v150 = vld [vmem:[#allocation2 + $0x1b0] sm:$0xff]
    %v151 = vld [vmem:[#allocation2 + $0x1b8] sm:$0xff]
    %v152 = vld [vmem:[#allocation2 + $0x1c0] sm:$0xff]
    %v153 = vld [vmem:[#allocation2 + $0x1c8] sm:$0xff]
    %v154 = vld [vmem:[#allocation2 + $0x1d0] sm:$0xff]
    %v155 = vld [vmem:[#allocation2 + $0x1d8] sm:$0xff]
    %v156 = vld [vmem:[#allocation2 + $0x1e0] sm:$0xff]
    %v157 = vld [vmem:[#allocation2 + $0x1e8] sm:$0xff]
    %v158 = vld [vmem:[#allocation2 + $0x1f0] sm:$0xff]
    %v159 = vld [vmem:[#allocation2 + $0x1f8] sm:$0xff]
    %v160 = vld [vmem:[#allocation2 + $0x200] sm:$0xff]
    %v161 = vld [vmem:[#allocation2 + $0x208] sm:$0xff]
    %v162 = vld [vmem:[#allocation2 + $0x210] sm:$0xff]
    %v163 = vld [vmem:[#allocation2 + $0x218] sm:$0xff]
    %v164 = vld [vmem:[#allocation2 + $0x220] sm:$0xff]
    %v165 = vld [vmem:[#allocation2 + $0x228] sm:$0xff]
    %v166 = vld [vmem:[#allocation2 + $0x230] sm:$0xff]
    %v167 = vld [vmem:[#allocation2 + $0x238] sm:$0xff]
    %v168 = vld [vmem:[#allocation2 + $0x240] sm:$0xff]
    %v169 = vld [vmem:[#allocation2 + $0x248] sm:$0xff]
    %v170 = vld [vmem:[#allocation2 + $0x250] sm:$0xff]
    %v171 = vld [vmem:[#allocation2 + $0x258] sm:$0xff]
    %v172 = vld [vmem:[#allocation2 + $0x260] sm:$0xff]
    %v173 = vld [vmem:[#allocation2 + $0x268] sm:$0xff]
    %v174 = vld [vmem:[#allocation2 + $0x270] sm:$0xff]
    %v175 = vld [vmem:[#allocation2 + $0x278] sm:$0xff]
    %v176 = vld [vmem:[#allocation2 + $0x280] sm:$0xff]
    %v177 = vld [vmem:[#allocation2 + $0x288] sm:$0xff]
    %v178 = vld [vmem:[#allocation2 + $0x290] sm:$0xff]
    %v179 = vld [vmem:[#allocation2 + $0x298] sm:$0xff]
    %v180 = vld [vmem:[#allocation2 + $0x2a0] sm:$0xff]
    %v181 = vld [vmem:[#allocation2 + $0x2a8] sm:$0xff]
    %v182 = vld [vmem:[#allocation2 + $0x2b0] sm:$0xff]
    %v183 = vld [vmem:[#allocation2 + $0x2b8] sm:$0xff]
    %v184 = vld [vmem:[#allocation2 + $0x2c0] sm:$0xff]
    %v185 = vld [vmem:[#allocation2 + $0x2c8] sm:$0xff]
    %v186 = vld [vmem:[#allocation2 + $0x2d0] sm:$0xff]
    %v187 = vld [vmem:[#allocation2 + $0x2d8] sm:$0xff]
    %v188 = vld [vmem:[#allocation2 + $0x2e0] sm:$0xff]
    %v189 = vld [vmem:[#allocation2 + $0x2e8] sm:$0xff]
    %v190 = vld [vmem:[#allocation2 + $0x2f0] sm:$0xff]
    %v191 = vld [vmem:[#allocation2 + $0x2f8] sm:$0xff]
    %v192 = vld [vmem:[#allocation2 + $0x300] sm:$0xff]
    %v193 = vld [vmem:[#allocation2 + $0x308] sm:$0xff]
    %v194 = vld [vmem:[#allocation2 + $0x310] sm:$0xff]
    %v195 = vld [vmem:[#allocation2 + $0x318] sm:$0xff]
    %v196 = vld [vmem:[#allocation2 + $0x320] sm:$0xff]
    %v197 = vld [vmem:[#allocation2 + $0x328] sm:$0xff]
    %v198 = vld [vmem:[#allocation2 + $0x330] sm:$0xff]
    %v199 = vld [vmem:[#allocation2 + $0x338] sm:$0xff]
    %v200 = vld [vmem:[#allocation2 + $0x340] sm:$0xff]
    %v201 = vld [vmem:[#allocation2 + $0x348] sm:$0xff]
    %v202 = vld [vmem:[#allocation2 + $0x350] sm:$0xff]
    %v203 = vld [vmem:[#allocation2 + $0x358] sm:$0xff]
    %v204 = vld [vmem:[#allocation2 + $0x360] sm:$0xff]
    %v205 = vld [vmem:[#allocation2 + $0x368] sm:$0xff]
    %v206 = vld [vmem:[#allocation2 + $0x370] sm:$0xff]
    %v207 = vld [vmem:[#allocation2 + $0x378] sm:$0xff]
    %v208 = vld [vmem:[#allocation2 + $0x380] sm:$0xff]
    %v209 = vld [vmem:[#allocation2 + $0x388] sm:$0xff]
    %v210 = vld [vmem:[#allocation2 + $0x390] sm:$0xff]
    %v211 = vld [vmem:[#allocation2 + $0x398] sm:$0xff]
    %v212 = vld [vmem:[#allocation2 + $0x3a0] sm:$0xff]
    %v213 = vld [vmem:[#allocation2 + $0x3a8] sm:$0xff]
    %v214 = vld [vmem:[#allocation2 + $0x3b0] sm:$0xff]
    %v215 = vld [vmem:[#allocation2 + $0x3b8] sm:$0xff]
    %v216 = vld [vmem:[#allocation2 + $0x3c0] sm:$0xff]
    %v217 = vld [vmem:[#allocation2 + $0x3c8] sm:$0xff]
    %v218 = vld [vmem:[#allocation2 + $0x3d0] sm:$0xff]
    %v219 = vld [vmem:[#allocation2 + $0x3d8] sm:$0xff]
    %v220 = vld [vmem:[#allocation2 + $0x3e0] sm:$0xff]
    %v221 = vld [vmem:[#allocation2 + $0x3e8] sm:$0xff]
    %v222 = vld [vmem:[#allocation2 + $0x3f0] sm:$0xff]
    %v223 = vld [vmem:[#allocation2 + $0x3f8] sm:$0xff]
    %v224 = vld [vmem:[%s3] sm:$0x3]
    %v226 = vlaneseq
    %v227 = vshrl.u32 %v226, 7
    %v228 = vsub.s32 0, %v227
    %v229 = vrot.slane %v224, %v228
    %v230 = vlaneseq
    %v231 = vshrl.u32 %v230, 7
    %v232 = vsub.s32 1, %v231
    %v233 = vrot.slane %v224, %v232
    %v364 = vunpack.c.l.b16 %v96
    %v365 = vunpack.c.h.b16 %v96
    %v366 = vunpack.c.l.b16 %v97
    %v367 = vunpack.c.h.b16 %v97
    %v368 = vunpack.c.l.b16 %v98
    %v369 = vunpack.c.h.b16 %v98
    %v370 = vunpack.c.l.b16 %v99
    %v371 = vunpack.c.h.b16 %v99
    %v372 = vunpack.c.l.b16 %v100
    %v373 = vunpack.c.h.b16 %v100
    %v374 = vunpack.c.l.b16 %v101
    %v375 = vunpack.c.h.b16 %v101
    %v376 = vunpack.c.l.b16 %v102
    %v377 = vunpack.c.h.b16 %v102
    %v378 = vunpack.c.l.b16 %v103
    %v379 = vunpack.c.h.b16 %v103
    %v380 = vunpack.c.l.b16 %v104
    %v381 = vunpack.c.h.b16 %v104
    %v382 = vunpack.c.l.b16 %v105
    %v383 = vunpack.c.h.b16 %v105
    %v384 = vunpack.c.l.b16 %v106
    %v385 = vunpack.c.h.b16 %v106
    %v386 = vunpack.c.l.b16 %v107
    %v387 = vunpack.c.h.b16 %v107
    %v388 = vunpack.c.l.b16 %v108
    %v389 = vunpack.c.h.b16 %v108
    %v390 = vunpack.c.l.b16 %v109
    %v391 = vunpack.c.h.b16 %v109
    %v392 = vunpack.c.l.b16 %v110
    %v393 = vunpack.c.h.b16 %v110
    %v394 = vunpack.c.l.b16 %v111
    %v395 = vunpack.c.h.b16 %v111
    %v396 = vunpack.c.l.b16 %v112
    %v397 = vunpack.c.h.b16 %v112
    %v398 = vunpack.c.l.b16 %v113
    %v399 = vunpack.c.h.b16 %v113
    %v400 = vunpack.c.l.b16 %v114
    %v401 = vunpack.c.h.b16 %v114
    %v402 = vunpack.c.l.b16 %v115
    %v403 = vunpack.c.h.b16 %v115
    %v404 = vunpack.c.l.b16 %v116
    %v405 = vunpack.c.h.b16 %v116
    %v406 = vunpack.c.l.b16 %v117
    %v407 = vunpack.c.h.b16 %v117
    %v408 = vunpack.c.l.b16 %v118
    %v409 = vunpack.c.h.b16 %v118
    %v410 = vunpack.c.l.b16 %v119
    %v411 = vunpack.c.h.b16 %v119
    %v412 = vunpack.c.l.b16 %v120
    %v413 = vunpack.c.h.b16 %v120
    %v414 = vunpack.c.l.b16 %v121
    %v415 = vunpack.c.h.b16 %v121
    %v416 = vunpack.c.l.b16 %v122
    %v417 = vunpack.c.h.b16 %v122
    %v418 = vunpack.c.l.b16 %v123
    %v419 = vunpack.c.h.b16 %v123
    %v420 = vunpack.c.l.b16 %v124
    %v421 = vunpack.c.h.b16 %v124
    %v422 = vunpack.c.l.b16 %v125
    %v423 = vunpack.c.h.b16 %v125
    %v424 = vunpack.c.l.b16 %v126
    %v425 = vunpack.c.h.b16 %v126
    %v426 = vunpack.c.l.b16 %v127
    %v427 = vunpack.c.h.b16 %v127
    %v428 = vunpack.c.l.b16 %v128
    %v429 = vunpack.c.h.b16 %v128
    %v430 = vunpack.c.l.b16 %v129
    %v431 = vunpack.c.h.b16 %v129
    %v432 = vunpack.c.l.b16 %v130
    %v433 = vunpack.c.h.b16 %v130
    %v434 = vunpack.c.l.b16 %v131
    %v435 = vunpack.c.h.b16 %v131
    %v436 = vunpack.c.l.b16 %v132
    %v437 = vunpack.c.h.b16 %v132
    %v438 = vunpack.c.l.b16 %v133
    %v439 = vunpack.c.h.b16 %v133
    %v440 = vunpack.c.l.b16 %v134
    %v441 = vunpack.c.h.b16 %v134
    %v442 = vunpack.c.l.b16 %v135
    %v443 = vunpack.c.h.b16 %v135
    %v444 = vunpack.c.l.b16 %v136
    %v445 = vunpack.c.h.b16 %v136
    %v446 = vunpack.c.l.b16 %v137
    %v447 = vunpack.c.h.b16 %v137
    %v448 = vunpack.c.l.b16 %v138
    %v449 = vunpack.c.h.b16 %v138
    %v450 = vunpack.c.l.b16 %v139
    %v451 = vunpack.c.h.b16 %v139
    %v452 = vunpack.c.l.b16 %v140
    %v453 = vunpack.c.h.b16 %v140
    %v454 = vunpack.c.l.b16 %v141
    %v455 = vunpack.c.h.b16 %v141
    %v456 = vunpack.c.l.b16 %v142
    %v457 = vunpack.c.h.b16 %v142
    %v458 = vunpack.c.l.b16 %v143
    %v459 = vunpack.c.h.b16 %v143
    %v460 = vunpack.c.l.b16 %v144
    %v461 = vunpack.c.h.b16 %v144
    %v462 = vunpack.c.l.b16 %v145
    %v463 = vunpack.c.h.b16 %v145
    %v464 = vunpack.c.l.b16 %v146
    %v465 = vunpack.c.h.b16 %v146
    %v466 = vunpack.c.l.b16 %v147
    %v467 = vunpack.c.h.b16 %v147
    %v468 = vunpack.c.l.b16 %v148
    %v469 = vunpack.c.h.b16 %v148
    %v470 = vunpack.c.l.b16 %v149
    %v471 = vunpack.c.h.b16 %v149
    %v472 = vunpack.c.l.b16 %v150
    %v473 = vunpack.c.h.b16 %v150
    %v474 = vunpack.c.l.b16 %v151
    %v475 = vunpack.c.h.b16 %v151
    %v476 = vunpack.c.l.b16 %v152
    %v477 = vunpack.c.h.b16 %v152
    %v478 = vunpack.c.l.b16 %v153
    %v479 = vunpack.c.h.b16 %v153
    %v480 = vunpack.c.l.b16 %v154
    %v481 = vunpack.c.h.b16 %v154
    %v482 = vunpack.c.l.b16 %v155
    %v483 = vunpack.c.h.b16 %v155
    %v484 = vunpack.c.l.b16 %v156
    %v485 = vunpack.c.h.b16 %v156
    %v486 = vunpack.c.l.b16 %v157
    %v487 = vunpack.c.h.b16 %v157
    %v488 = vunpack.c.l.b16 %v158
    %v489 = vunpack.c.h.b16 %v158
    %v490 = vunpack.c.l.b16 %v159
    %v491 = vunpack.c.h.b16 %v159
    %v492 = vunpack.c.l.b16 %v160
    %v493 = vunpack.c.h.b16 %v160
    %v494 = vunpack.c.l.b16 %v161
    %v495 = vunpack.c.h.b16 %v161
    %v496 = vunpack.c.l.b16 %v162
    %v497 = vunpack.c.h.b16 %v162
    %v498 = vunpack.c.l.b16 %v163
    %v499 = vunpack.c.h.b16 %v163
    %v500 = vunpack.c.l.b16 %v164
    %v501 = vunpack.c.h.b16 %v164
    %v502 = vunpack.c.l.b16 %v165
    %v503 = vunpack.c.h.b16 %v165
    %v504 = vunpack.c.l.b16 %v166
    %v505 = vunpack.c.h.b16 %v166
    %v506 = vunpack.c.l.b16 %v167
    %v507 = vunpack.c.h.b16 %v167
    %v508 = vunpack.c.l.b16 %v168
    %v509 = vunpack.c.h.b16 %v168
    %v510 = vunpack.c.l.b16 %v169
    %v511 = vunpack.c.h.b16 %v169
    %v512 = vunpack.c.l.b16 %v170
    %v513 = vunpack.c.h.b16 %v170
    %v514 = vunpack.c.l.b16 %v171
    %v515 = vunpack.c.h.b16 %v171
    %v516 = vunpack.c.l.b16 %v172
    %v517 = vunpack.c.h.b16 %v172
    %v518 = vunpack.c.l.b16 %v173
    %v519 = vunpack.c.h.b16 %v173
    %v520 = vunpack.c.l.b16 %v174
    %v521 = vunpack.c.h.b16 %v174
    %v522 = vunpack.c.l.b16 %v175
    %v523 = vunpack.c.h.b16 %v175
    %v524 = vunpack.c.l.b16 %v176
    %v525 = vunpack.c.h.b16 %v176
    %v526 = vunpack.c.l.b16 %v177
    %v527 = vunpack.c.h.b16 %v177
    %v528 = vunpack.c.l.b16 %v178
    %v529 = vunpack.c.h.b16 %v178
    %v530 = vunpack.c.l.b16 %v179
    %v531 = vunpack.c.h.b16 %v179
    %v532 = vunpack.c.l.b16 %v180
    %v533 = vunpack.c.h.b16 %v180
    %v534 = vunpack.c.l.b16 %v181
    %v535 = vunpack.c.h.b16 %v181
    %v536 = vunpack.c.l.b16 %v182
    %v537 = vunpack.c.h.b16 %v182
    %v538 = vunpack.c.l.b16 %v183
    %v539 = vunpack.c.h.b16 %v183
    %v540 = vunpack.c.l.b16 %v184
    %v541 = vunpack.c.h.b16 %v184
    %v542 = vunpack.c.l.b16 %v185
    %v543 = vunpack.c.h.b16 %v185
    %v544 = vunpack.c.l.b16 %v186
    %v545 = vunpack.c.h.b16 %v186
    %v546 = vunpack.c.l.b16 %v187
    %v547 = vunpack.c.h.b16 %v187
    %v548 = vunpack.c.l.b16 %v188
    %v549 = vunpack.c.h.b16 %v188
    %v550 = vunpack.c.l.b16 %v189
    %v551 = vunpack.c.h.b16 %v189
    %v552 = vunpack.c.l.b16 %v190
    %v553 = vunpack.c.h.b16 %v190
    %v554 = vunpack.c.l.b16 %v191
    %v555 = vunpack.c.h.b16 %v191
    %v556 = vunpack.c.l.b16 %v192
    %v557 = vunpack.c.h.b16 %v192
    %v558 = vunpack.c.l.b16 %v193
    %v559 = vunpack.c.h.b16 %v193
    %v560 = vunpack.c.l.b16 %v194
    %v561 = vunpack.c.h.b16 %v194
    %v562 = vunpack.c.l.b16 %v195
    %v563 = vunpack.c.h.b16 %v195
    %v564 = vunpack.c.l.b16 %v196
    %v565 = vunpack.c.h.b16 %v196
    %v566 = vunpack.c.l.b16 %v197
    %v567 = vunpack.c.h.b16 %v197
    %v568 = vunpack.c.l.b16 %v198
    %v569 = vunpack.c.h.b16 %v198
    %v570 = vunpack.c.l.b16 %v199
    %v571 = vunpack.c.h.b16 %v199
    %v572 = vunpack.c.l.b16 %v200
    %v573 = vunpack.c.h.b16 %v200
    %v574 = vunpack.c.l.b16 %v201
    %v575 = vunpack.c.h.b16 %v201
    %v576 = vunpack.c.l.b16 %v202
    %v577 = vunpack.c.h.b16 %v202
    %v578 = vunpack.c.l.b16 %v203
    %v579 = vunpack.c.h.b16 %v203
    %v580 = vunpack.c.l.b16 %v204
    %v581 = vunpack.c.h.b16 %v204
    %v582 = vunpack.c.l.b16 %v205
    %v583 = vunpack.c.h.b16 %v205
    %v584 = vunpack.c.l.b16 %v206
    %v585 = vunpack.c.h.b16 %v206
    %v586 = vunpack.c.l.b16 %v207
    %v587 = vunpack.c.h.b16 %v207
    %v588 = vunpack.c.l.b16 %v208
    %v589 = vunpack.c.h.b16 %v208
    %v590 = vunpack.c.l.b16 %v209
    %v591 = vunpack.c.h.b16 %v209
    %v592 = vunpack.c.l.b16 %v210
    %v593 = vunpack.c.h.b16 %v210
    %v594 = vunpack.c.l.b16 %v211
    %v595 = vunpack.c.h.b16 %v211
    %v596 = vunpack.c.l.b16 %v212
    %v597 = vunpack.c.h.b16 %v212
    %v598 = vunpack.c.l.b16 %v213
    %v599 = vunpack.c.h.b16 %v213
    %v600 = vunpack.c.l.b16 %v214
    %v601 = vunpack.c.h.b16 %v214
    %v602 = vunpack.c.l.b16 %v215
    %v603 = vunpack.c.h.b16 %v215
    %v604 = vunpack.c.l.b16 %v216
    %v605 = vunpack.c.h.b16 %v216
    %v606 = vunpack.c.l.b16 %v217
    %v607 = vunpack.c.h.b16 %v217
    %v608 = vunpack.c.l.b16 %v218
    %v609 = vunpack.c.h.b16 %v218
    %v610 = vunpack.c.l.b16 %v219
    %v611 = vunpack.c.h.b16 %v219
    %v612 = vunpack.c.l.b16 %v220
    %v613 = vunpack.c.h.b16 %v220
    %v614 = vunpack.c.l.b16 %v221
    %v615 = vunpack.c.h.b16 %v221
    %v616 = vunpack.c.l.b16 %v222
    %v617 = vunpack.c.h.b16 %v222
    %v618 = vunpack.c.l.b16 %v223
    %v619 = vunpack.c.h.b16 %v223
    %v620 = vpack.c.b16 %v366, %v364
    %v621 = vpack.c.b16 %v367, %v365
    %v622 = vpack.c.b16 %v370, %v368
    %v623 = vpack.c.b16 %v371, %v369
    %v624 = vpack.c.b16 %v374, %v372
    %v625 = vpack.c.b16 %v375, %v373
    %v626 = vpack.c.b16 %v378, %v376
    %v627 = vpack.c.b16 %v379, %v377
    %v628 = vpack.c.b16 %v382, %v380
    %v629 = vpack.c.b16 %v383, %v381
    %v630 = vpack.c.b16 %v386, %v384
    %v631 = vpack.c.b16 %v387, %v385
    %v632 = vpack.c.b16 %v390, %v388
    %v633 = vpack.c.b16 %v391, %v389
    %v634 = vpack.c.b16 %v394, %v392
    %v635 = vpack.c.b16 %v395, %v393
    %v636 = vpack.c.b16 %v398, %v396
    %v637 = vpack.c.b16 %v399, %v397
    %v638 = vpack.c.b16 %v402, %v400
    %v639 = vpack.c.b16 %v403, %v401
    %v640 = vpack.c.b16 %v406, %v404
    %v641 = vpack.c.b16 %v407, %v405
    %v642 = vpack.c.b16 %v410, %v408
    %v643 = vpack.c.b16 %v411, %v409
    %v644 = vpack.c.b16 %v414, %v412
    %v645 = vpack.c.b16 %v415, %v413
    %v646 = vpack.c.b16 %v418, %v416
    %v647 = vpack.c.b16 %v419, %v417
    %v648 = vpack.c.b16 %v422, %v420
    %v649 = vpack.c.b16 %v423, %v421
    %v650 = vpack.c.b16 %v426, %v424
    %v651 = vpack.c.b16 %v427, %v425
    %v652 = vpack.c.b16 %v430, %v428
    %v653 = vpack.c.b16 %v431, %v429
    %v654 = vpack.c.b16 %v434, %v432
    %v655 = vpack.c.b16 %v435, %v433
    %v656 = vpack.c.b16 %v438, %v436
    %v657 = vpack.c.b16 %v439, %v437
    %v658 = vpack.c.b16 %v442, %v440
    %v659 = vpack.c.b16 %v443, %v441
    %v660 = vpack.c.b16 %v446, %v444
    %v661 = vpack.c.b16 %v447, %v445
    %v662 = vpack.c.b16 %v450, %v448
    %v663 = vpack.c.b16 %v451, %v449
    %v664 = vpack.c.b16 %v454, %v452
    %v665 = vpack.c.b16 %v455, %v453
    %v666 = vpack.c.b16 %v458, %v456
    %v667 = vpack.c.b16 %v459, %v457
    %v668 = vpack.c.b16 %v462, %v460
    %v669 = vpack.c.b16 %v463, %v461
    %v670 = vpack.c.b16 %v466, %v464
    %v671 = vpack.c.b16 %v467, %v465
    %v672 = vpack.c.b16 %v470, %v468
    %v673 = vpack.c.b16 %v471, %v469
    %v674 = vpack.c.b16 %v474, %v472
    %v675 = vpack.c.b16 %v475, %v473
    %v676 = vpack.c.b16 %v478, %v476
    %v677 = vpack.c.b16 %v479, %v477
    %v678 = vpack.c.b16 %v482, %v480
    %v679 = vpack.c.b16 %v483, %v481
    %v680 = vpack.c.b16 %v486, %v484
    %v681 = vpack.c.b16 %v487, %v485
    %v682 = vpack.c.b16 %v490, %v488
    %v683 = vpack.c.b16 %v491, %v489
    %v684 = vpack.c.b16 %v494, %v492
    %v685 = vpack.c.b16 %v495, %v493
    %v686 = vpack.c.b16 %v498, %v496
    %v687 = vpack.c.b16 %v499, %v497
    %v688 = vpack.c.b16 %v502, %v500
    %v689 = vpack.c.b16 %v503, %v501
    %v690 = vpack.c.b16 %v506, %v504
    %v691 = vpack.c.b16 %v507, %v505
    %v692 = vpack.c.b16 %v510, %v508
    %v693 = vpack.c.b16 %v511, %v509
    %v694 = vpack.c.b16 %v514, %v512
    %v695 = vpack.c.b16 %v515, %v513
    %v696 = vpack.c.b16 %v518, %v516
    %v697 = vpack.c.b16 %v519, %v517
    %v698 = vpack.c.b16 %v522, %v520
    %v699 = vpack.c.b16 %v523, %v521
    %v700 = vpack.c.b16 %v526, %v524
    %v701 = vpack.c.b16 %v527, %v525
    %v702 = vpack.c.b16 %v530, %v528
    %v703 = vpack.c.b16 %v531, %v529
    %v704 = vpack.c.b16 %v534, %v532
    %v705 = vpack.c.b16 %v535, %v533
    %v706 = vpack.c.b16 %v538, %v536
    %v707 = vpack.c.b16 %v539, %v537
    %v708 = vpack.c.b16 %v542, %v540
    %v709 = vpack.c.b16 %v543, %v541
    %v710 = vpack.c.b16 %v546, %v544
    %v711 = vpack.c.b16 %v547, %v545
    %v712 = vpack.c.b16 %v550, %v548
    %v713 = vpack.c.b16 %v551, %v549
    %v714 = vpack.c.b16 %v554, %v552
    %v715 = vpack.c.b16 %v555, %v553
    %v716 = vpack.c.b16 %v558, %v556
    %v717 = vpack.c.b16 %v559, %v557
    %v718 = vpack.c.b16 %v562, %v560
    %v719 = vpack.c.b16 %v563, %v561
    %v720 = vpack.c.b16 %v566, %v564
    %v721 = vpack.c.b16 %v567, %v565
    %v722 = vpack.c.b16 %v570, %v568
    %v723 = vpack.c.b16 %v571, %v569
    %v724 = vpack.c.b16 %v574, %v572
    %v725 = vpack.c.b16 %v575, %v573
    %v726 = vpack.c.b16 %v578, %v576
    %v727 = vpack.c.b16 %v579, %v577
    %v728 = vpack.c.b16 %v582, %v580
    %v729 = vpack.c.b16 %v583, %v581
    %v730 = vpack.c.b16 %v586, %v584
    %v731 = vpack.c.b16 %v587, %v585
    %v732 = vpack.c.b16 %v590, %v588
    %v733 = vpack.c.b16 %v591, %v589
    %v734 = vpack.c.b16 %v594, %v592
    %v735 = vpack.c.b16 %v595, %v593
    %v736 = vpack.c.b16 %v598, %v596
    %v737 = vpack.c.b16 %v599, %v597
    %v738 = vpack.c.b16 %v602, %v600
    %v739 = vpack.c.b16 %v603, %v601
    %v740 = vpack.c.b16 %v606, %v604
    %v741 = vpack.c.b16 %v607, %v605
    %v742 = vpack.c.b16 %v610, %v608
    %v743 = vpack.c.b16 %v611, %v609
    %v744 = vpack.c.b16 %v614, %v612
    %v745 = vpack.c.b16 %v615, %v613
    %v746 = vpack.c.b16 %v618, %v616
    %v747 = vpack.c.b16 %v619, %v617
    %876 = vmatprep.subr.bf16.mxu0 %v621
    %877 = vmatpush1.bf16.msra.mxu0 %v620
    %878 = vmatprep.subr.bf16.mxu0 %v623
    %879 = vmatpush1.bf16.msra.mxu0 %v622
    %880 = vmatprep.subr.bf16.mxu0 %v625
    %881 = vmatpush1.bf16.msra.mxu0 %v624
    %882 = vmatprep.subr.bf16.mxu0 %v627
    %883 = vmatpush1.bf16.msra.mxu0 %v626
    %884 = vmatprep.subr.bf16.mxu0 %v629
    %885 = vmatpush1.bf16.msra.mxu0 %v628
    %886 = vmatprep.subr.bf16.mxu0 %v631
    %887 = vmatpush1.bf16.msra.mxu0 %v630
    %888 = vmatprep.subr.bf16.mxu0 %v633
    %889 = vmatpush1.bf16.msra.mxu0 %v632
    %890 = vmatprep.subr.bf16.mxu0 %v635
    %891 = vmatpush1.bf16.msra.mxu0 %v634
    %892 = vmatprep.subr.bf16.mxu0 %v637
    %893 = vmatpush1.bf16.msra.mxu0 %v636
    %894 = vmatprep.subr.bf16.mxu0 %v639
    %895 = vmatpush1.bf16.msra.mxu0 %v638
    %896 = vmatprep.subr.bf16.mxu0 %v641
    %897 = vmatpush1.bf16.msra.mxu0 %v640
    %898 = vmatprep.subr.bf16.mxu0 %v643
    %899 = vmatpush1.bf16.msra.mxu0 %v642
    %900 = vmatprep.subr.bf16.mxu0 %v645
    %901 = vmatpush1.bf16.msra.mxu0 %v644
    %902 = vmatprep.subr.bf16.mxu0 %v647
    %903 = vmatpush1.bf16.msra.mxu0 %v646
    %904 = vmatprep.subr.bf16.mxu0 %v649
    %905 = vmatpush1.bf16.msra.mxu0 %v648
    %906 = vmatprep.subr.bf16.mxu0 %v651
    %907 = vmatpush1.bf16.msra.mxu0 %v650
    %908 = vmatprep.mubr.bf16.mxu0 %v89
    %909 = vmatmul.mubr.bf16.gmra.mrb[0].mxu0 %v88
    %v910 = vpop.f32.mrb[0].mxu0
    %v911 = vadd.f32 %v229, %v910
    %v912 = vpop.f32.mrb[0].mxu0
    %v913 = vadd.f32 %v233, %v912
    %v914 = vpop.f32.mrb[0].mxu0
    %v915 = vpop.f32.mrb[0].mxu0
    %916 = vdwg.mxu0
    %917 = vmatprep.subr.bf16.mxu0 %v653
    %918 = vmatpush1.bf16.msra.mxu0 %v652
    %919 = vmatprep.subr.bf16.mxu0 %v655
    %920 = vmatpush1.bf16.msra.mxu0 %v654
    %921 = vmatprep.subr.bf16.mxu0 %v657
    %922 = vmatpush1.bf16.msra.mxu0 %v656
    %923 = vmatprep.subr.bf16.mxu0 %v659
    %924 = vmatpush1.bf16.msra.mxu0 %v658
    %925 = vmatprep.subr.bf16.mxu0 %v661
    %926 = vmatpush1.bf16.msra.mxu0 %v660
    %927 = vmatprep.subr.bf16.mxu0 %v663
    %928 = vmatpush1.bf16.msra.mxu0 %v662
    %929 = vmatprep.subr.bf16.mxu0 %v665
    %930 = vmatpush1.bf16.msra.mxu0 %v664
    %931 = vmatprep.subr.bf16.mxu0 %v667
    %932 = vmatpush1.bf16.msra.mxu0 %v666
    %933 = vmatprep.subr.bf16.mxu0 %v669
    %934 = vmatpush1.bf16.msra.mxu0 %v668
    %935 = vmatprep.subr.bf16.mxu0 %v671
    %936 = vmatpush1.bf16.msra.mxu0 %v670
    %937 = vmatprep.subr.bf16.mxu0 %v673
    %938 = vmatpush1.bf16.msra.mxu0 %v672
    %939 = vmatprep.subr.bf16.mxu0 %v675
    %940 = vmatpush1.bf16.msra.mxu0 %v674
    %941 = vmatprep.subr.bf16.mxu0 %v677
    %942 = vmatpush1.bf16.msra.mxu0 %v676
    %943 = vmatprep.subr.bf16.mxu0 %v679
    %944 = vmatpush1.bf16.msra.mxu0 %v678
    %945 = vmatprep.subr.bf16.mxu0 %v681
    %946 = vmatpush1.bf16.msra.mxu0 %v680
    %947 = vmatprep.subr.bf16.mxu0 %v683
    %948 = vmatpush1.bf16.msra.mxu0 %v682
    %949 = vmatprep.mubr.bf16.mxu0 %v91
    %950 = vmatmul.mubr.bf16.gmra.mrb[0].mxu0 %v90
    %v951 = vpop.f32.mrb[0].mxu0
    %v952 = vadd.f32 %v911, %v951
    %v953 = vpop.f32.mrb[0].mxu0
    %v954 = vadd.f32 %v913, %v953
    %v955 = vpop.f32.mrb[0].mxu0
    %v956 = vpop.f32.mrb[0].mxu0
    %957 = vdwg.mxu0
    %958 = vmatprep.subr.bf16.mxu0 %v685
    %959 = vmatpush1.bf16.msra.mxu0 %v684
    %960 = vmatprep.subr.bf16.mxu0 %v687
    %961 = vmatpush1.bf16.msra.mxu0 %v686
    %962 = vmatprep.subr.bf16.mxu0 %v689
    %963 = vmatpush1.bf16.msra.mxu0 %v688
    %964 = vmatprep.subr.bf16.mxu0 %v691
    %965 = vmatpush1.bf16.msra.mxu0 %v690
    %966 = vmatprep.subr.bf16.mxu0 %v693
    %967 = vmatpush1.bf16.msra.mxu0 %v692
    %968 = vmatprep.subr.bf16.mxu0 %v695
    %969 = vmatpush1.bf16.msra.mxu0 %v694
    %970 = vmatprep.subr.bf16.mxu0 %v697
    %971 = vmatpush1.bf16.msra.mxu0 %v696
    %972 = vmatprep.subr.bf16.mxu0 %v699
    %973 = vmatpush1.bf16.msra.mxu0 %v698
    %974 = vmatprep.subr.bf16.mxu0 %v701
    %975 = vmatpush1.bf16.msra.mxu0 %v700
    %976 = vmatprep.subr.bf16.mxu0 %v703
    %977 = vmatpush1.bf16.msra.mxu0 %v702
    %978 = vmatprep.subr.bf16.mxu0 %v705
    %979 = vmatpush1.bf16.msra.mxu0 %v704
    %980 = vmatprep.subr.bf16.mxu0 %v707
    %981 = vmatpush1.bf16.msra.mxu0 %v706
    %982 = vmatprep.subr.bf16.mxu0 %v709
    %983 = vmatpush1.bf16.msra.mxu0 %v708
    %984 = vmatprep.subr.bf16.mxu0 %v711
    %985 = vmatpush1.bf16.msra.mxu0 %v710
    %986 = vmatprep.subr.bf16.mxu0 %v713
    %987 = vmatpush1.bf16.msra.mxu0 %v712
    %988 = vmatprep.subr.bf16.mxu0 %v715
    %989 = vmatpush1.bf16.msra.mxu0 %v714
    %990 = vmatprep.mubr.bf16.mxu0 %v93
    %991 = vmatmul.mubr.bf16.gmra.mrb[0].mxu0 %v92
    %v992 = vpop.f32.mrb[0].mxu0
    %v993 = vadd.f32 %v952, %v992
    %v994 = vpop.f32.mrb[0].mxu0
    %v995 = vadd.f32 %v954, %v994
    %v996 = vpop.f32.mrb[0].mxu0
    %v997 = vpop.f32.mrb[0].mxu0
    %998 = vdwg.mxu0
    %999 = vmatprep.subr.bf16.mxu0 %v717
    %1000 = vmatpush1.bf16.msra.mxu0 %v716
    %1001 = vmatprep.subr.bf16.mxu0 %v719
    %1002 = vmatpush1.bf16.msra.mxu0 %v718
    %1003 = vmatprep.subr.bf16.mxu0 %v721
    %1004 = vmatpush1.bf16.msra.mxu0 %v720
    %1005 = vmatprep.subr.bf16.mxu0 %v723
    %1006 = vmatpush1.bf16.msra.mxu0 %v722
    %1007 = vmatprep.subr.bf16.mxu0 %v725
    %1008 = vmatpush1.bf16.msra.mxu0 %v724
    %1009 = vmatprep.subr.bf16.mxu0 %v727
    %1010 = vmatpush1.bf16.msra.mxu0 %v726
    %1011 = vmatprep.subr.bf16.mxu0 %v729
    %1012 = vmatpush1.bf16.msra.mxu0 %v728
    %1013 = vmatprep.subr.bf16.mxu0 %v731
    %1014 = vmatpush1.bf16.msra.mxu0 %v730
    %1015 = vmatprep.subr.bf16.mxu0 %v733
    %1016 = vmatpush1.bf16.msra.mxu0 %v732
    %1017 = vmatprep.subr.bf16.mxu0 %v735
    %1018 = vmatpush1.bf16.msra.mxu0 %v734
    %1019 = vmatprep.subr.bf16.mxu0 %v737
    %1020 = vmatpush1.bf16.msra.mxu0 %v736
    %1021 = vmatprep.subr.bf16.mxu0 %v739
    %1022 = vmatpush1.bf16.msra.mxu0 %v738
    %1023 = vmatprep.subr.bf16.mxu0 %v741
    %1024 = vmatpush1.bf16.msra.mxu0 %v740
    %1025 = vmatprep.subr.bf16.mxu0 %v743
    %1026 = vmatpush1.bf16.msra.mxu0 %v742
    %1027 = vmatprep.subr.bf16.mxu0 %v745
    %1028 = vmatpush1.bf16.msra.mxu0 %v744
    %1029 = vmatprep.subr.bf16.mxu0 %v747
    %1030 = vmatpush1.bf16.msra.mxu0 %v746
    %1031 = vmatprep.mubr.bf16.mxu0 %v95
    %1032 = vmatmul.mubr.bf16.gmra.mrb[0].mxu0 %v94
    %v1033 = vpop.f32.mrb[0].mxu0
    %v1034 = vadd.f32 %v993, %v1033
    %v1035 = vpop.f32.mrb[0].mxu0
    %v1036 = vadd.f32 %v995, %v1035
    %v1037 = vpop.f32.mrb[0].mxu0
    %v1038 = vpop.f32.mrb[0].mxu0
    %1039 = vdwg.mxu0
    %v1040 = vmax.f32 %v1034, 0.0
    %v1041 = vmax.f32 %v1036, 0.0
    %v1042 = vpack.c.bf16 %v1040, %v1040
    %v1043 = vpack.c.bf16 %v1041, %v1041
    %v1044 = vld [vmem:[%s4] sm:$0xf]
    %v1045 = vld [vmem:[%s4 + $0x4] sm:$0xf]
    %v1046 = vld [vmem:[%s4 + $0x8] sm:$0xf]
    %v1047 = vld [vmem:[%s4 + $0xc] sm:$0xf]
    %v1048 = vld [vmem:[%s4 + $0x10] sm:$0xf]
    %v1049 = vld [vmem:[%s4 + $0x14] sm:$0xf]
    %v1050 = vld [vmem:[%s4 + $0x18] sm:$0xf]
    %v1051 = vld [vmem:[%s4 + $0x1c] sm:$0xf]
    %v1052 = vld [vmem:[%s4 + $0x20] sm:$0xf]
    %v1053 = vld [vmem:[%s4 + $0x24] sm:$0xf]
    %v1054 = vld [vmem:[%s4 + $0x28] sm:$0xf]
    %v1055 = vld [vmem:[%s4 + $0x2c] sm:$0xf]
    %v1056 = vld [vmem:[%s4 + $0x30] sm:$0xf]
    %v1057 = vld [vmem:[%s4 + $0x34] sm:$0xf]
    %v1058 = vld [vmem:[%s4 + $0x38] sm:$0xf]
    %v1059 = vld [vmem:[%s4 + $0x3c] sm:$0xf]
    %v1060 = vld [vmem:[%s4 + $0x40] sm:$0xf]
    %v1061 = vld [vmem:[%s4 + $0x44] sm:$0xf]
    %v1062 = vld [vmem:[%s4 + $0x48] sm:$0xf]
    %v1063 = vld [vmem:[%s4 + $0x4c] sm:$0xf]
    %v1064 = vld [vmem:[%s4 + $0x50] sm:$0xf]
    %v1065 = vld [vmem:[%s4 + $0x54] sm:$0xf]
    %v1066 = vld [vmem:[%s4 + $0x58] sm:$0xf]
    %v1067 = vld [vmem:[%s4 + $0x5c] sm:$0xf]
    %v1068 = vld [vmem:[%s4 + $0x60] sm:$0xf]
    %v1069 = vld [vmem:[%s4 + $0x64] sm:$0xf]
    %v1070 = vld [vmem:[%s4 + $0x68] sm:$0xf]
    %v1071 = vld [vmem:[%s4 + $0x6c] sm:$0xf]
    %v1072 = vld [vmem:[%s4 + $0x70] sm:$0xf]
    %v1073 = vld [vmem:[%s4 + $0x74] sm:$0xf]
    %v1074 = vld [vmem:[%s4 + $0x78] sm:$0xf]
    %v1075 = vld [vmem:[%s4 + $0x7c] sm:$0xf]
    %v1076 = vld [vmem:[%s5] sm:$0x1]
    %v1078 = vlaneseq
    %v1079 = vshrl.u32 %v1078, 7
    %v1080 = vsub.s32 0, %v1079
    %v1081 = vrot.slane %v1076, %v1080
    %v1115 = vunpack.c.l.b16 %v1044
    %v1116 = vunpack.c.l.b16 %v1045
    %v1117 = vunpack.c.l.b16 %v1046
    %v1118 = vunpack.c.l.b16 %v1047
    %v1119 = vunpack.c.l.b16 %v1048
    %v1120 = vunpack.c.l.b16 %v1049
    %v1121 = vunpack.c.l.b16 %v1050
    %v1122 = vunpack.c.l.b16 %v1051
    %v1123 = vunpack.c.l.b16 %v1052
    %v1124 = vunpack.c.l.b16 %v1053
    %v1125 = vunpack.c.l.b16 %v1054
    %v1126 = vunpack.c.l.b16 %v1055
    %v1127 = vunpack.c.l.b16 %v1056
    %v1128 = vunpack.c.l.b16 %v1057
    %v1129 = vunpack.c.l.b16 %v1058
    %v1130 = vunpack.c.l.b16 %v1059
    %v1131 = vunpack.c.l.b16 %v1060
    %v1132 = vunpack.c.l.b16 %v1061
    %v1133 = vunpack.c.l.b16 %v1062
    %v1134 = vunpack.c.l.b16 %v1063
    %v1135 = vunpack.c.l.b16 %v1064
    %v1136 = vunpack.c.l.b16 %v1065
    %v1137 = vunpack.c.l.b16 %v1066
    %v1138 = vunpack.c.l.b16 %v1067
    %v1139 = vunpack.c.l.b16 %v1068
    %v1140 = vunpack.c.l.b16 %v1069
    %v1141 = vunpack.c.l.b16 %v1070
    %v1142 = vunpack.c.l.b16 %v1071
    %v1143 = vunpack.c.l.b16 %v1072
    %v1144 = vunpack.c.l.b16 %v1073
    %v1145 = vunpack.c.l.b16 %v1074
    %v1146 = vunpack.c.l.b16 %v1075
    %v1147 = vpack.c.b16 %v1116, %v1115
    %v1148 = vpack.c.b16 %v1118, %v1117
    %v1149 = vpack.c.b16 %v1120, %v1119
    %v1150 = vpack.c.b16 %v1122, %v1121
    %v1151 = vpack.c.b16 %v1124, %v1123
    %v1152 = vpack.c.b16 %v1126, %v1125
    %v1153 = vpack.c.b16 %v1128, %v1127
    %v1154 = vpack.c.b16 %v1130, %v1129
    %v1155 = vpack.c.b16 %v1132, %v1131
    %v1156 = vpack.c.b16 %v1134, %v1133
    %v1157 = vpack.c.b16 %v1136, %v1135
    %v1158 = vpack.c.b16 %v1138, %v1137
    %v1159 = vpack.c.b16 %v1140, %v1139
    %v1160 = vpack.c.b16 %v1142, %v1141
    %v1161 = vpack.c.b16 %v1144, %v1143
    %v1162 = vpack.c.b16 %v1146, %v1145
    %1179 = vmatprep.subr.bf16.mxu0 0
    %1180 = vmatpush1.bf16.msra.mxu0 %v1147
    %1181 = vmatprep.subr.bf16.mxu0 0
    %1182 = vmatpush1.bf16.msra.mxu0 %v1148
    %1183 = vmatprep.subr.bf16.mxu0 0
    %1184 = vmatpush1.bf16.msra.mxu0 %v1149
    %1185 = vmatprep.subr.bf16.mxu0 0
    %1186 = vmatpush1.bf16.msra.mxu0 %v1150
    %1187 = vmatprep.subr.bf16.mxu0 0
    %1188 = vmatpush1.bf16.msra.mxu0 %v1151
    %1189 = vmatprep.subr.bf16.mxu0 0
    %1190 = vmatpush1.bf16.msra.mxu0 %v1152
    %1191 = vmatprep.subr.bf16.mxu0 0
    %1192 = vmatpush1.bf16.msra.mxu0 %v1153
    %1193 = vmatprep.subr.bf16.mxu0 0
    %1194 = vmatpush1.bf16.msra.mxu0 %v1154
    %1195 = vmatprep.subr.bf16.mxu0 0
    %1196 = vmatpush1.bf16.msra.mxu0 %v1155
    %1197 = vmatprep.subr.bf16.mxu0 0
    %1198 = vmatpush1.bf16.msra.mxu0 %v1156
    %1199 = vmatprep.subr.bf16.mxu0 0
    %1200 = vmatpush1.bf16.msra.mxu0 %v1157
    %1201 = vmatprep.subr.bf16.mxu0 0
    %1202 = vmatpush1.bf16.msra.mxu0 %v1158
    %1203 = vmatprep.subr.bf16.mxu0 0
    %1204 = vmatpush1.bf16.msra.mxu0 %v1159
    %1205 = vmatprep.subr.bf16.mxu0 0
    %1206 = vmatpush1.bf16.msra.mxu0 %v1160
    %1207 = vmatprep.subr.bf16.mxu0 0
    %1208 = vmatpush1.bf16.msra.mxu0 %v1161
    %1209 = vmatprep.subr.bf16.mxu0 0
    %1210 = vmatpush1.bf16.msra.mxu0 %v1162
    %1211 = vmatprep.mubr.bf16.mxu0 %v1043
    %1212 = vmatmul.mubr.bf16.gmra.mrb[0].mxu0 %v1042
    %v1213 = vpop.f32.mrb[0].mxu0
    %v1214 = vadd.f32 %v1081, %v1213
    %v1215 = vpop.f32.mrb[0].mxu0
    %v1216 = vpop.f32.mrb[0].mxu0
    %v1217 = vpop.f32.mrb[0].mxu0
    %1218 = vdwg.mxu0
    %1219 = vst [vmem:[#allocation5] sm:$0x3] %v1214
    %v1220 = vld [vmem:[%s1] sm:$0xff]
    %v1221 = vld [vmem:[%s1 + $0x8] sm:$0xff]
    %v1224 = vcombine.high %v1220, %v1220
    %v1226 = vunpack.c.l.s4 1983009808
    %v1227 = vunpack.c.0.s8 %v1226
    %v1228 = vlaneseq
    %v1229 = vshrl.u32 %v1228, 7
    %v1230 = vsub.s32 %v1227, %v1229
    %v1231 = vrot.slane %v1220, %v1230
    %v1233 = vunpack.c.l.s4 1983009808
    %v1234 = vunpack.c.0.s8 %v1233
    %v1235 = vlaneseq
    %v1236 = vshrl.u32 %v1235, 7
    %v1237 = vsub.s32 %v1234, %v1236
    %v1238 = vrot.slane %v1224, %v1237
    %v1239 = vcombine.high %v1231, %v1231
    %v1240 = vcombine.high %v1238, %v1238
    %v1241 = vcombine.high %v1221, %v1221
    %v1243 = vunpack.c.l.s4 1983009808
    %v1244 = vunpack.c.0.s8 %v1243
    %v1245 = vlaneseq
    %v1246 = vshrl.u32 %v1245, 7
    %v1247 = vsub.s32 %v1244, %v1246
    %v1248 = vrot.slane %v1221, %v1247
    %v1250 = vunpack.c.l.s4 1983009808
    %v1251 = vunpack.c.0.s8 %v1250
    %v1252 = vlaneseq
    %v1253 = vshrl.u32 %v1252, 7
    %v1254 = vsub.s32 %v1251, %v1253
    %v1255 = vrot.slane %v1241, %v1254
    %v1256 = vcombine.high %v1248, %v1248
    %v1257 = vcombine.high %v1255, %v1255
    %v1266 = vpack.c.bf16 %v1231, %v1231
    %v1267 = vpack.c.bf16 %v1239, %v1239
    %v1268 = vpack.c.bf16 %v1238, %v1238
    %v1269 = vpack.c.bf16 %v1240, %v1240
    %v1270 = vpack.c.bf16 %v1248, %v1248
    %v1271 = vpack.c.bf16 %v1256, %v1256
    %v1272 = vpack.c.bf16 %v1255, %v1255
    %v1273 = vpack.c.bf16 %v1257, %v1257
    %v1274 = vld [vmem:[#allocation2] sm:$0xff]
    %v1275 = vld [vmem:[#allocation2 + $0x8] sm:$0xff]
    %v1276 = vld [vmem:[#allocation2 + $0x10] sm:$0xff]
    %v1277 = vld [vmem:[#allocation2 + $0x18] sm:$0xff]
    %v1278 = vld [vmem:[#allocation2 + $0x20] sm:$0xff]
    %v1279 = vld [vmem:[#allocation2 + $0x28] sm:$0xff]
    %v1280 = vld [vmem:[#allocation2 + $0x30] sm:$0xff]
    %v1281 = vld [vmem:[#allocation2 + $0x38] sm:$0xff]
    %v1282 = vld [vmem:[#allocation2 + $0x40] sm:$0xff]
    %v1283 = vld [vmem:[#allocation2 + $0x48] sm:$0xff]
    %v1284 = vld [vmem:[#allocation2 + $0x50] sm:$0xff]
    %v1285 = vld [vmem:[#allocation2 + $0x58] sm:$0xff]
    %v1286 = vld [vmem:[#allocation2 + $0x60] sm:$0xff]
    %v1287 = vld [vmem:[#allocation2 + $0x68] sm:$0xff]
    %v1288 = vld [vmem:[#allocation2 + $0x70] sm:$0xff]
    %v1289 = vld [vmem:[#allocation2 + $0x78] sm:$0xff]
    %v1290 = vld [vmem:[#allocation2 + $0x80] sm:$0xff]
    %v1291 = vld [vmem:[#allocation2 + $0x88] sm:$0xff]
    %v1292 = vld [vmem:[#allocation2 + $0x90] sm:$0xff]
    %v1293 = vld [vmem:[#allocation2 + $0x98] sm:$0xff]
    %v1294 = vld [vmem:[#allocation2 + $0xa0] sm:$0xff]
    %v1295 = vld [vmem:[#allocation2 + $0xa8] sm:$0xff]
    %v1296 = vld [vmem:[#allocation2 + $0xb0] sm:$0xff]
    %v1297 = vld [vmem:[#allocation2 + $0xb8] sm:$0xff]
    %v1298 = vld [vmem:[#allocation2 + $0xc0] sm:$0xff]
    %v1299 = vld [vmem:[#allocation2 + $0xc8] sm:$0xff]
    %v1300 = vld [vmem:[#allocation2 + $0xd0] sm:$0xff]
    %v1301 = vld [vmem:[#allocation2 + $0xd8] sm:$0xff]
    %v1302 = vld [vmem:[#allocation2 + $0xe0] sm:$0xff]
    %v1303 = vld [vmem:[#allocation2 + $0xe8] sm:$0xff]
    %v1304 = vld [vmem:[#allocation2 + $0xf0] sm:$0xff]
    %v1305 = vld [vmem:[#allocation2 + $0xf8] sm:$0xff]
    %v1306 = vld [vmem:[#allocation2 + $0x100] sm:$0xff]
    %v1307 = vld [vmem:[#allocation2 + $0x108] sm:$0xff]
    %v1308 = vld [vmem:[#allocation2 + $0x110] sm:$0xff]
    %v1309 = vld [vmem:[#allocation2 + $0x118] sm:$0xff]
    %v1310 = vld [vmem:[#allocation2 + $0x120] sm:$0xff]
    %v1311 = vld [vmem:[#allocation2 + $0x128] sm:$0xff]
    %v1312 = vld [vmem:[#allocation2 + $0x130] sm:$0xff]
    %v1313 = vld [vmem:[#allocation2 + $0x138] sm:$0xff]
    %v1314 = vld [vmem:[#allocation2 + $0x140] sm:$0xff]
    %v1315 = vld [vmem:[#allocation2 + $0x148] sm:$0xff]
    %v1316 = vld [vmem:[#allocation2 + $0x150] sm:$0xff]
    %v1317 = vld [vmem:[#allocation2 + $0x158] sm:$0xff]
    %v1318 = vld [vmem:[#allocation2 + $0x160] sm:$0xff]
    %v1319 = vld [vmem:[#allocation2 + $0x168] sm:$0xff]
    %v1320 = vld [vmem:[#allocation2 + $0x170] sm:$0xff]
    %v1321 = vld [vmem:[#allocation2 + $0x178] sm:$0xff]
    %v1322 = vld [vmem:[#allocation2 + $0x180] sm:$0xff]
    %v1323 = vld [vmem:[#allocation2 + $0x188] sm:$0xff]
    %v1324 = vld [vmem:[#allocation2 + $0x190] sm:$0xff]
    %v1325 = vld [vmem:[#allocation2 + $0x198] sm:$0xff]
    %v1326 = vld [vmem:[#allocation2 + $0x1a0] sm:$0xff]
    %v1327 = vld [vmem:[#allocation2 + $0x1a8] sm:$0xff]
    %v1328 = vld [vmem:[#allocation2 + $0x1b0] sm:$0xff]
    %v1329 = vld [vmem:[#allocation2 + $0x1b8] sm:$0xff]
    %v1330 = vld [vmem:[#allocation2 + $0x1c0] sm:$0xff]
    %v1331 = vld [vmem:[#allocation2 + $0x1c8] sm:$0xff]
    %v1332 = vld [vmem:[#allocation2 + $0x1d0] sm:$0xff]
    %v1333 = vld [vmem:[#allocation2 + $0x1d8] sm:$0xff]
    %v1334 = vld [vmem:[#allocation2 + $0x1e0] sm:$0xff]
    %v1335 = vld [vmem:[#allocation2 + $0x1e8] sm:$0xff]
    %v1336 = vld [vmem:[#allocation2 + $0x1f0] sm:$0xff]
    %v1337 = vld [vmem:[#allocation2 + $0x1f8] sm:$0xff]
    %v1338 = vld [vmem:[#allocation2 + $0x200] sm:$0xff]
    %v1339 = vld [vmem:[#allocation2 + $0x208] sm:$0xff]
    %v1340 = vld [vmem:[#allocation2 + $0x210] sm:$0xff]
    %v1341 = vld [vmem:[#allocation2 + $0x218] sm:$0xff]
    %v1342 = vld [vmem:[#allocation2 + $0x220] sm:$0xff]
    %v1343 = vld [vmem:[#allocation2 + $0x228] sm:$0xff]
    %v1344 = vld [vmem:[#allocation2 + $0x230] sm:$0xff]
    %v1345 = vld [vmem:[#allocation2 + $0x238] sm:$0xff]
    %v1346 = vld [vmem:[#allocation2 + $0x240] sm:$0xff]
    %v1347 = vld [vmem:[#allocation2 + $0x248] sm:$0xff]
    %v1348 = vld [vmem:[#allocation2 + $0x250] sm:$0xff]
    %v1349 = vld [vmem:[#allocation2 + $0x258] sm:$0xff]
    %v1350 = vld [vmem:[#allocation2 + $0x260] sm:$0xff]
    %v1351 = vld [vmem:[#allocation2 + $0x268] sm:$0xff]
    %v1352 = vld [vmem:[#allocation2 + $0x270] sm:$0xff]
    %v1353 = vld [vmem:[#allocation2 + $0x278] sm:$0xff]
    %v1354 = vld [vmem:[#allocation2 + $0x280] sm:$0xff]
    %v1355 = vld [vmem:[#allocation2 + $0x288] sm:$0xff]
    %v1356 = vld [vmem:[#allocation2 + $0x290] sm:$0xff]
    %v1357 = vld [vmem:[#allocation2 + $0x298] sm:$0xff]
    %v1358 = vld [vmem:[#allocation2 + $0x2a0] sm:$0xff]
    %v1359 = vld [vmem:[#allocation2 + $0x2a8] sm:$0xff]
    %v1360 = vld [vmem:[#allocation2 + $0x2b0] sm:$0xff]
    %v1361 = vld [vmem:[#allocation2 + $0x2b8] sm:$0xff]
    %v1362 = vld [vmem:[#allocation2 + $0x2c0] sm:$0xff]
    %v1363 = vld [vmem:[#allocation2 + $0x2c8] sm:$0xff]
    %v1364 = vld [vmem:[#allocation2 + $0x2d0] sm:$0xff]
    %v1365 = vld [vmem:[#allocation2 + $0x2d8] sm:$0xff]
    %v1366 = vld [vmem:[#allocation2 + $0x2e0] sm:$0xff]
    %v1367 = vld [vmem:[#allocation2 + $0x2e8] sm:$0xff]
    %v1368 = vld [vmem:[#allocation2 + $0x2f0] sm:$0xff]
    %v1369 = vld [vmem:[#allocation2 + $0x2f8] sm:$0xff]
    %v1370 = vld [vmem:[#allocation2 + $0x300] sm:$0xff]
    %v1371 = vld [vmem:[#allocation2 + $0x308] sm:$0xff]
    %v1372 = vld [vmem:[#allocation2 + $0x310] sm:$0xff]
    %v1373 = vld [vmem:[#allocation2 + $0x318] sm:$0xff]
    %v1374 = vld [vmem:[#allocation2 + $0x320] sm:$0xff]
    %v1375 = vld [vmem:[#allocation2 + $0x328] sm:$0xff]
    %v1376 = vld [vmem:[#allocation2 + $0x330] sm:$0xff]
    %v1377 = vld [vmem:[#allocation2 + $0x338] sm:$0xff]
    %v1378 = vld [vmem:[#allocation2 + $0x340] sm:$0xff]
    %v1379 = vld [vmem:[#allocation2 + $0x348] sm:$0xff]
    %v1380 = vld [vmem:[#allocation2 + $0x350] sm:$0xff]
    %v1381 = vld [vmem:[#allocation2 + $0x358] sm:$0xff]
    %v1382 = vld [vmem:[#allocation2 + $0x360] sm:$0xff]
    %v1383 = vld [vmem:[#allocation2 + $0x368] sm:$0xff]
    %v1384 = vld [vmem:[#allocation2 + $0x370] sm:$0xff]
    %v1385 = vld [vmem:[#allocation2 + $0x378] sm:$0xff]
    %v1386 = vld [vmem:[#allocation2 + $0x380] sm:$0xff]
    %v1387 = vld [vmem:[#allocation2 + $0x388] sm:$0xff]
    %v1388 = vld [vmem:[#allocation2 + $0x390] sm:$0xff]
    %v1389 = vld [vmem:[#allocation2 + $0x398] sm:$0xff]
    %v1390 = vld [vmem:[#allocation2 + $0x3a0] sm:$0xff]
    %v1391 = vld [vmem:[#allocation2 + $0x3a8] sm:$0xff]
    %v1392 = vld [vmem:[#allocation2 + $0x3b0] sm:$0xff]
    %v1393 = vld [vmem:[#allocation2 + $0x3b8] sm:$0xff]
    %v1394 = vld [vmem:[#allocation2 + $0x3c0] sm:$0xff]
    %v1395 = vld [vmem:[#allocation2 + $0x3c8] sm:$0xff]
    %v1396 = vld [vmem:[#allocation2 + $0x3d0] sm:$0xff]
    %v1397 = vld [vmem:[#allocation2 + $0x3d8] sm:$0xff]
    %v1398 = vld [vmem:[#allocation2 + $0x3e0] sm:$0xff]
    %v1399 = vld [vmem:[#allocation2 + $0x3e8] sm:$0xff]
    %v1400 = vld [vmem:[#allocation2 + $0x3f0] sm:$0xff]
    %v1401 = vld [vmem:[#allocation2 + $0x3f8] sm:$0xff]
    %v1402 = vld [vmem:[%s3] sm:$0x3]
    %v1404 = vlaneseq
    %v1405 = vshrl.u32 %v1404, 7
    %v1406 = vsub.s32 0, %v1405
    %v1407 = vrot.slane %v1402, %v1406
    %v1408 = vlaneseq
    %v1409 = vshrl.u32 %v1408, 7
    %v1410 = vsub.s32 1, %v1409
    %v1411 = vrot.slane %v1402, %v1410
    %v1542 = vunpack.c.l.b16 %v1274
    %v1543 = vunpack.c.h.b16 %v1274
    %v1544 = vunpack.c.l.b16 %v1275
    %v1545 = vunpack.c.h.b16 %v1275
    %v1546 = vunpack.c.l.b16 %v1276
    %v1547 = vunpack.c.h.b16 %v1276
    %v1548 = vunpack.c.l.b16 %v1277
    %v1549 = vunpack.c.h.b16 %v1277
    %v1550 = vunpack.c.l.b16 %v1278
    %v1551 = vunpack.c.h.b16 %v1278
    %v1552 = vunpack.c.l.b16 %v1279
    %v1553 = vunpack.c.h.b16 %v1279
    %v1554 = vunpack.c.l.b16 %v1280
    %v1555 = vunpack.c.h.b16 %v1280
    %v1556 = vunpack.c.l.b16 %v1281
    %v1557 = vunpack.c.h.b16 %v1281
    %v1558 = vunpack.c.l.b16 %v1282
    %v1559 = vunpack.c.h.b16 %v1282
    %v1560 = vunpack.c.l.b16 %v1283
    %v1561 = vunpack.c.h.b16 %v1283
    %v1562 = vunpack.c.l.b16 %v1284
    %v1563 = vunpack.c.h.b16 %v1284
    %v1564 = vunpack.c.l.b16 %v1285
    %v1565 = vunpack.c.h.b16 %v1285
    %v1566 = vunpack.c.l.b16 %v1286
    %v1567 = vunpack.c.h.b16 %v1286
    %v1568 = vunpack.c.l.b16 %v1287
    %v1569 = vunpack.c.h.b16 %v1287
    %v1570 = vunpack.c.l.b16 %v1288
    %v1571 = vunpack.c.h.b16 %v1288
    %v1572 = vunpack.c.l.b16 %v1289
    %v1573 = vunpack.c.h.b16 %v1289
    %v1574 = vunpack.c.l.b16 %v1290
    %v1575 = vunpack.c.h.b16 %v1290
    %v1576 = vunpack.c.l.b16 %v1291
    %v1577 = vunpack.c.h.b16 %v1291
    %v1578 = vunpack.c.l.b16 %v1292
    %v1579 = vunpack.c.h.b16 %v1292
    %v1580 = vunpack.c.l.b16 %v1293
    %v1581 = vunpack.c.h.b16 %v1293
    %v1582 = vunpack.c.l.b16 %v1294
    %v1583 = vunpack.c.h.b16 %v1294
    %v1584 = vunpack.c.l.b16 %v1295
    %v1585 = vunpack.c.h.b16 %v1295
    %v1586 = vunpack.c.l.b16 %v1296
    %v1587 = vunpack.c.h.b16 %v1296
    %v1588 = vunpack.c.l.b16 %v1297
    %v1589 = vunpack.c.h.b16 %v1297
    %v1590 = vunpack.c.l.b16 %v1298
    %v1591 = vunpack.c.h.b16 %v1298
    %v1592 = vunpack.c.l.b16 %v1299
    %v1593 = vunpack.c.h.b16 %v1299
    %v1594 = vunpack.c.l.b16 %v1300
    %v1595 = vunpack.c.h.b16 %v1300
    %v1596 = vunpack.c.l.b16 %v1301
    %v1597 = vunpack.c.h.b16 %v1301
    %v1598 = vunpack.c.l.b16 %v1302
    %v1599 = vunpack.c.h.b16 %v1302
    %v1600 = vunpack.c.l.b16 %v1303
    %v1601 = vunpack.c.h.b16 %v1303
    %v1602 = vunpack.c.l.b16 %v1304
    %v1603 = vunpack.c.h.b16 %v1304
    %v1604 = vunpack.c.l.b16 %v1305
    %v1605 = vunpack.c.h.b16 %v1305
    %v1606 = vunpack.c.l.b16 %v1306
    %v1607 = vunpack.c.h.b16 %v1306
    %v1608 = vunpack.c.l.b16 %v1307
    %v1609 = vunpack.c.h.b16 %v1307
    %v1610 = vunpack.c.l.b16 %v1308
    %v1611 = vunpack.c.h.b16 %v1308
    %v1612 = vunpack.c.l.b16 %v1309
    %v1613 = vunpack.c.h.b16 %v1309
    %v1614 = vunpack.c.l.b16 %v1310
    %v1615 = vunpack.c.h.b16 %v1310
    %v1616 = vunpack.c.l.b16 %v1311
    %v1617 = vunpack.c.h.b16 %v1311
    %v1618 = vunpack.c.l.b16 %v1312
    %v1619 = vunpack.c.h.b16 %v1312
    %v1620 = vunpack.c.l.b16 %v1313
    %v1621 = vunpack.c.h.b16 %v1313
    %v1622 = vunpack.c.l.b16 %v1314
    %v1623 = vunpack.c.h.b16 %v1314
    %v1624 = vunpack.c.l.b16 %v1315
    %v1625 = vunpack.c.h.b16 %v1315
    %v1626 = vunpack.c.l.b16 %v1316
    %v1627 = vunpack.c.h.b16 %v1316
    %v1628 = vunpack.c.l.b16 %v1317
    %v1629 = vunpack.c.h.b16 %v1317
    %v1630 = vunpack.c.l.b16 %v1318
    %v1631 = vunpack.c.h.b16 %v1318
    %v1632 = vunpack.c.l.b16 %v1319
    %v1633 = vunpack.c.h.b16 %v1319
    %v1634 = vunpack.c.l.b16 %v1320
    %v1635 = vunpack.c.h.b16 %v1320
    %v1636 = vunpack.c.l.b16 %v1321
    %v1637 = vunpack.c.h.b16 %v1321
    %v1638 = vunpack.c.l.b16 %v1322
    %v1639 = vunpack.c.h.b16 %v1322
    %v1640 = vunpack.c.l.b16 %v1323
    %v1641 = vunpack.c.h.b16 %v1323
    %v1642 = vunpack.c.l.b16 %v1324
    %v1643 = vunpack.c.h.b16 %v1324
    %v1644 = vunpack.c.l.b16 %v1325
    %v1645 = vunpack.c.h.b16 %v1325
    %v1646 = vunpack.c.l.b16 %v1326
    %v1647 = vunpack.c.h.b16 %v1326
    %v1648 = vunpack.c.l.b16 %v1327
    %v1649 = vunpack.c.h.b16 %v1327
    %v1650 = vunpack.c.l.b16 %v1328
    %v1651 = vunpack.c.h.b16 %v1328
    %v1652 = vunpack.c.l.b16 %v1329
    %v1653 = vunpack.c.h.b16 %v1329
    %v1654 = vunpack.c.l.b16 %v1330
    %v1655 = vunpack.c.h.b16 %v1330
    %v1656 = vunpack.c.l.b16 %v1331
    %v1657 = vunpack.c.h.b16 %v1331
    %v1658 = vunpack.c.l.b16 %v1332
    %v1659 = vunpack.c.h.b16 %v1332
    %v1660 = vunpack.c.l.b16 %v1333
    %v1661 = vunpack.c.h.b16 %v1333
    %v1662 = vunpack.c.l.b16 %v1334
    %v1663 = vunpack.c.h.b16 %v1334
    %v1664 = vunpack.c.l.b16 %v1335
    %v1665 = vunpack.c.h.b16 %v1335
    %v1666 = vunpack.c.l.b16 %v1336
    %v1667 = vunpack.c.h.b16 %v1336
    %v1668 = vunpack.c.l.b16 %v1337
    %v1669 = vunpack.c.h.b16 %v1337
    %v1670 = vunpack.c.l.b16 %v1338
    %v1671 = vunpack.c.h.b16 %v1338
    %v1672 = vunpack.c.l.b16 %v1339
    %v1673 = vunpack.c.h.b16 %v1339
    %v1674 = vunpack.c.l.b16 %v1340
    %v1675 = vunpack.c.h.b16 %v1340
    %v1676 = vunpack.c.l.b16 %v1341
    %v1677 = vunpack.c.h.b16 %v1341
    %v1678 = vunpack.c.l.b16 %v1342
    %v1679 = vunpack.c.h.b16 %v1342
    %v1680 = vunpack.c.l.b16 %v1343
    %v1681 = vunpack.c.h.b16 %v1343
    %v1682 = vunpack.c.l.b16 %v1344
    %v1683 = vunpack.c.h.b16 %v1344
    %v1684 = vunpack.c.l.b16 %v1345
    %v1685 = vunpack.c.h.b16 %v1345
    %v1686 = vunpack.c.l.b16 %v1346
    %v1687 = vunpack.c.h.b16 %v1346
    %v1688 = vunpack.c.l.b16 %v1347
    %v1689 = vunpack.c.h.b16 %v1347
    %v1690 = vunpack.c.l.b16 %v1348
    %v1691 = vunpack.c.h.b16 %v1348
    %v1692 = vunpack.c.l.b16 %v1349
    %v1693 = vunpack.c.h.b16 %v1349
    %v1694 = vunpack.c.l.b16 %v1350
    %v1695 = vunpack.c.h.b16 %v1350
    %v1696 = vunpack.c.l.b16 %v1351
    %v1697 = vunpack.c.h.b16 %v1351
    %v1698 = vunpack.c.l.b16 %v1352
    %v1699 = vunpack.c.h.b16 %v1352
    %v1700 = vunpack.c.l.b16 %v1353
    %v1701 = vunpack.c.h.b16 %v1353
    %v1702 = vunpack.c.l.b16 %v1354
    %v1703 = vunpack.c.h.b16 %v1354
    %v1704 = vunpack.c.l.b16 %v1355
    %v1705 = vunpack.c.h.b16 %v1355
    %v1706 = vunpack.c.l.b16 %v1356
    %v1707 = vunpack.c.h.b16 %v1356
    %v1708 = vunpack.c.l.b16 %v1357
    %v1709 = vunpack.c.h.b16 %v1357
    %v1710 = vunpack.c.l.b16 %v1358
    %v1711 = vunpack.c.h.b16 %v1358
    %v1712 = vunpack.c.l.b16 %v1359
    %v1713 = vunpack.c.h.b16 %v1359
    %v1714 = vunpack.c.l.b16 %v1360
    %v1715 = vunpack.c.h.b16 %v1360
    %v1716 = vunpack.c.l.b16 %v1361
    %v1717 = vunpack.c.h.b16 %v1361
    %v1718 = vunpack.c.l.b16 %v1362
    %v1719 = vunpack.c.h.b16 %v1362
    %v1720 = vunpack.c.l.b16 %v1363
    %v1721 = vunpack.c.h.b16 %v1363
    %v1722 = vunpack.c.l.b16 %v1364
    %v1723 = vunpack.c.h.b16 %v1364
    %v1724 = vunpack.c.l.b16 %v1365
    %v1725 = vunpack.c.h.b16 %v1365
    %v1726 = vunpack.c.l.b16 %v1366
    %v1727 = vunpack.c.h.b16 %v1366
    %v1728 = vunpack.c.l.b16 %v1367
    %v1729 = vunpack.c.h.b16 %v1367
    %v1730 = vunpack.c.l.b16 %v1368
    %v1731 = vunpack.c.h.b16 %v1368
    %v1732 = vunpack.c.l.b16 %v1369
    %v1733 = vunpack.c.h.b16 %v1369
    %v1734 = vunpack.c.l.b16 %v1370
    %v1735 = vunpack.c.h.b16 %v1370
    %v1736 = vunpack.c.l.b16 %v1371
    %v1737 = vunpack.c.h.b16 %v1371
    %v1738 = vunpack.c.l.b16 %v1372
    %v1739 = vunpack.c.h.b16 %v1372
    %v1740 = vunpack.c.l.b16 %v1373
    %v1741 = vunpack.c.h.b16 %v1373
    %v1742 = vunpack.c.l.b16 %v1374
    %v1743 = vunpack.c.h.b16 %v1374
    %v1744 = vunpack.c.l.b16 %v1375
    %v1745 = vunpack.c.h.b16 %v1375
    %v1746 = vunpack.c.l.b16 %v1376
    %v1747 = vunpack.c.h.b16 %v1376
    %v1748 = vunpack.c.l.b16 %v1377
    %v1749 = vunpack.c.h.b16 %v1377
    %v1750 = vunpack.c.l.b16 %v1378
    %v1751 = vunpack.c.h.b16 %v1378
    %v1752 = vunpack.c.l.b16 %v1379
    %v1753 = vunpack.c.h.b16 %v1379
    %v1754 = vunpack.c.l.b16 %v1380
    %v1755 = vunpack.c.h.b16 %v1380
    %v1756 = vunpack.c.l.b16 %v1381
    %v1757 = vunpack.c.h.b16 %v1381
    %v1758 = vunpack.c.l.b16 %v1382
    %v1759 = vunpack.c.h.b16 %v1382
    %v1760 = vunpack.c.l.b16 %v1383
    %v1761 = vunpack.c.h.b16 %v1383
    %v1762 = vunpack.c.l.b16 %v1384
    %v1763 = vunpack.c.h.b16 %v1384
    %v1764 = vunpack.c.l.b16 %v1385
    %v1765 = vunpack.c.h.b16 %v1385
    %v1766 = vunpack.c.l.b16 %v1386
    %v1767 = vunpack.c.h.b16 %v1386
    %v1768 = vunpack.c.l.b16 %v1387
    %v1769 = vunpack.c.h.b16 %v1387
    %v1770 = vunpack.c.l.b16 %v1388
    %v1771 = vunpack.c.h.b16 %v1388
    %v1772 = vunpack.c.l.b16 %v1389
    %v1773 = vunpack.c.h.b16 %v1389
    %v1774 = vunpack.c.l.b16 %v1390
    %v1775 = vunpack.c.h.b16 %v1390
    %v1776 = vunpack.c.l.b16 %v1391
    %v1777 = vunpack.c.h.b16 %v1391
    %v1778 = vunpack.c.l.b16 %v1392
    %v1779 = vunpack.c.h.b16 %v1392
    %v1780 = vunpack.c.l.b16 %v1393
    %v1781 = vunpack.c.h.b16 %v1393
    %v1782 = vunpack.c.l.b16 %v1394
    %v1783 = vunpack.c.h.b16 %v1394
    %v1784 = vunpack.c.l.b16 %v1395
    %v1785 = vunpack.c.h.b16 %v1395
    %v1786 = vunpack.c.l.b16 %v1396
    %v1787 = vunpack.c.h.b16 %v1396
    %v1788 = vunpack.c.l.b16 %v1397
    %v1789 = vunpack.c.h.b16 %v1397
    %v1790 = vunpack.c.l.b16 %v1398
    %v1791 = vunpack.c.h.b16 %v1398
    %v1792 = vunpack.c.l.b16 %v1399
    %v1793 = vunpack.c.h.b16 %v1399
    %v1794 = vunpack.c.l.b16 %v1400
    %v1795 = vunpack.c.h.b16 %v1400
    %v1796 = vunpack.c.l.b16 %v1401
    %v1797 = vunpack.c.h.b16 %v1401
    %v1798 = vpack.c.b16 %v1544, %v1542
    %v1799 = vpack.c.b16 %v1545, %v1543
    %v1800 = vpack.c.b16 %v1548, %v1546
    %v1801 = vpack.c.b16 %v1549, %v1547
    %v1802 = vpack.c.b16 %v1552, %v1550
    %v1803 = vpack.c.b16 %v1553, %v1551
    %v1804 = vpack.c.b16 %v1556, %v1554
    %v1805 = vpack.c.b16 %v1557, %v1555
    %v1806 = vpack.c.b16 %v1560, %v1558
    %v1807 = vpack.c.b16 %v1561, %v1559
    %v1808 = vpack.c.b16 %v1564, %v1562
    %v1809 = vpack.c.b16 %v1565, %v1563
    %v1810 = vpack.c.b16 %v1568, %v1566
    %v1811 = vpack.c.b16 %v1569, %v1567
    %v1812 = vpack.c.b16 %v1572, %v1570
    %v1813 = vpack.c.b16 %v1573, %v1571
    %v1814 = vpack.c.b16 %v1576, %v1574
    %v1815 = vpack.c.b16 %v1577, %v1575
    %v1816 = vpack.c.b16 %v1580, %v1578
    %v1817 = vpack.c.b16 %v1581, %v1579
    %v1818 = vpack.c.b16 %v1584, %v1582
    %v1819 = vpack.c.b16 %v1585, %v1583
    %v1820 = vpack.c.b16 %v1588, %v1586
    %v1821 = vpack.c.b16 %v1589, %v1587
    %v1822 = vpack.c.b16 %v1592, %v1590
    %v1823 = vpack.c.b16 %v1593, %v1591
    %v1824 = vpack.c.b16 %v1596, %v1594
    %v1825 = vpack.c.b16 %v1597, %v1595
    %v1826 = vpack.c.b16 %v1600, %v1598
    %v1827 = vpack.c.b16 %v1601, %v1599
    %v1828 = vpack.c.b16 %v1604, %v1602
    %v1829 = vpack.c.b16 %v1605, %v1603
    %v1830 = vpack.c.b16 %v1608, %v1606
    %v1831 = vpack.c.b16 %v1609, %v1607
    %v1832 = vpack.c.b16 %v1612, %v1610
    %v1833 = vpack.c.b16 %v1613, %v1611
    %v1834 = vpack.c.b16 %v1616, %v1614
    %v1835 = vpack.c.b16 %v1617, %v1615
    %v1836 = vpack.c.b16 %v1620, %v1618
    %v1837 = vpack.c.b16 %v1621, %v1619
    %v1838 = vpack.c.b16 %v1624, %v1622
    %v1839 = vpack.c.b16 %v1625, %v1623
    %v1840 = vpack.c.b16 %v1628, %v1626
    %v1841 = vpack.c.b16 %v1629, %v1627
    %v1842 = vpack.c.b16 %v1632, %v1630
    %v1843 = vpack.c.b16 %v1633, %v1631
    %v1844 = vpack.c.b16 %v1636, %v1634
    %v1845 = vpack.c.b16 %v1637, %v1635
    %v1846 = vpack.c.b16 %v1640, %v1638
    %v1847 = vpack.c.b16 %v1641, %v1639
    %v1848 = vpack.c.b16 %v1644, %v1642
    %v1849 = vpack.c.b16 %v1645, %v1643
    %v1850 = vpack.c.b16 %v1648, %v1646
    %v1851 = vpack.c.b16 %v1649, %v1647
    %v1852 = vpack.c.b16 %v1652, %v1650
    %v1853 = vpack.c.b16 %v1653, %v1651
    %v1854 = vpack.c.b16 %v1656, %v1654
    %v1855 = vpack.c.b16 %v1657, %v1655
    %v1856 = vpack.c.b16 %v1660, %v1658
    %v1857 = vpack.c.b16 %v1661, %v1659
    %v1858 = vpack.c.b16 %v1664, %v1662
    %v1859 = vpack.c.b16 %v1665, %v1663
    %v1860 = vpack.c.b16 %v1668, %v1666
    %v1861 = vpack.c.b16 %v1669, %v1667
    %v1862 = vpack.c.b16 %v1672, %v1670
    %v1863 = vpack.c.b16 %v1673, %v1671
    %v1864 = vpack.c.b16 %v1676, %v1674
    %v1865 = vpack.c.b16 %v1677, %v1675
    %v1866 = vpack.c.b16 %v1680, %v1678
    %v1867 = vpack.c.b16 %v1681, %v1679
    %v1868 = vpack.c.b16 %v1684, %v1682
    %v1869 = vpack.c.b16 %v1685, %v1683
    %v1870 = vpack.c.b16 %v1688, %v1686
    %v1871 = vpack.c.b16 %v1689, %v1687
    %v1872 = vpack.c.b16 %v1692, %v1690
    %v1873 = vpack.c.b16 %v1693, %v1691
    %v1874 = vpack.c.b16 %v1696, %v1694
    %v1875 = vpack.c.b16 %v1697, %v1695
    %v1876 = vpack.c.b16 %v1700, %v1698
    %v1877 = vpack.c.b16 %v1701, %v1699
    %v1878 = vpack.c.b16 %v1704, %v1702
    %v1879 = vpack.c.b16 %v1705, %v1703
    %v1880 = vpack.c.b16 %v1708, %v1706
    %v1881 = vpack.c.b16 %v1709, %v1707
    %v1882 = vpack.c.b16 %v1712, %v1710
    %v1883 = vpack.c.b16 %v1713, %v1711
    %v1884 = vpack.c.b16 %v1716, %v1714
    %v1885 = vpack.c.b16 %v1717, %v1715
    %v1886 = vpack.c.b16 %v1720, %v1718
    %v1887 = vpack.c.b16 %v1721, %v1719
    %v1888 = vpack.c.b16 %v1724, %v1722
    %v1889 = vpack.c.b16 %v1725, %v1723
    %v1890 = vpack.c.b16 %v1728, %v1726
    %v1891 = vpack.c.b16 %v1729, %v1727
    %v1892 = vpack.c.b16 %v1732, %v1730
    %v1893 = vpack.c.b16 %v1733, %v1731
    %v1894 = vpack.c.b16 %v1736, %v1734
    %v1895 = vpack.c.b16 %v1737, %v1735
    %v1896 = vpack.c.b16 %v1740, %v1738
    %v1897 = vpack.c.b16 %v1741, %v1739
    %v1898 = vpack.c.b16 %v1744, %v1742
    %v1899 = vpack.c.b16 %v1745, %v1743
    %v1900 = vpack.c.b16 %v1748, %v1746
    %v1901 = vpack.c.b16 %v1749, %v1747
    %v1902 = vpack.c.b16 %v1752, %v1750
    %v1903 = vpack.c.b16 %v1753, %v1751
    %v1904 = vpack.c.b16 %v1756, %v1754
    %v1905 = vpack.c.b16 %v1757, %v1755
    %v1906 = vpack.c.b16 %v1760, %v1758
    %v1907 = vpack.c.b16 %v1761, %v1759
    %v1908 = vpack.c.b16 %v1764, %v1762
    %v1909 = vpack.c.b16 %v1765, %v1763
    %v1910 = vpack.c.b16 %v1768, %v1766
    %v1911 = vpack.c.b16 %v1769, %v1767
    %v1912 = vpack.c.b16 %v1772, %v1770
    %v1913 = vpack.c.b16 %v1773, %v1771
    %v1914 = vpack.c.b16 %v1776, %v1774
    %v1915 = vpack.c.b16 %v1777, %v1775
    %v1916 = vpack.c.b16 %v1780, %v1778
    %v1917 = vpack.c.b16 %v1781, %v1779
    %v1918 = vpack.c.b16 %v1784, %v1782
    %v1919 = vpack.c.b16 %v1785, %v1783
    %v1920 = vpack.c.b16 %v1788, %v1786
    %v1921 = vpack.c.b16 %v1789, %v1787
    %v1922 = vpack.c.b16 %v1792, %v1790
    %v1923 = vpack.c.b16 %v1793, %v1791
    %v1924 = vpack.c.b16 %v1796, %v1794
    %v1925 = vpack.c.b16 %v1797, %v1795
    %2054 = vmatprep.subr.bf16.mxu0 %v1799
    %2055 = vmatpush1.bf16.msra.mxu0 %v1798
    %2056 = vmatprep.subr.bf16.mxu0 %v1801
    %2057 = vmatpush1.bf16.msra.mxu0 %v1800
    %2058 = vmatprep.subr.bf16.mxu0 %v1803
    %2059 = vmatpush1.bf16.msra.mxu0 %v1802
    %2060 = vmatprep.subr.bf16.mxu0 %v1805
    %2061 = vmatpush1.bf16.msra.mxu0 %v1804
    %2062 = vmatprep.subr.bf16.mxu0 %v1807
    %2063 = vmatpush1.bf16.msra.mxu0 %v1806
    %2064 = vmatprep.subr.bf16.mxu0 %v1809
    %2065 = vmatpush1.bf16.msra.mxu0 %v1808
    %2066 = vmatprep.subr.bf16.mxu0 %v1811
    %2067 = vmatpush1.bf16.msra.mxu0 %v1810
    %2068 = vmatprep.subr.bf16.mxu0 %v1813
    %2069 = vmatpush1.bf16.msra.mxu0 %v1812
    %2070 = vmatprep.subr.bf16.mxu0 %v1815
    %2071 = vmatpush1.bf16.msra.mxu0 %v1814
    %2072 = vmatprep.subr.bf16.mxu0 %v1817
    %2073 = vmatpush1.bf16.msra.mxu0 %v1816
    %2074 = vmatprep.subr.bf16.mxu0 %v1819
    %2075 = vmatpush1.bf16.msra.mxu0 %v1818
    %2076 = vmatprep.subr.bf16.mxu0 %v1821
    %2077 = vmatpush1.bf16.msra.mxu0 %v1820
    %2078 = vmatprep.subr.bf16.mxu0 %v1823
    %2079 = vmatpush1.bf16.msra.mxu0 %v1822
    %2080 = vmatprep.subr.bf16.mxu0 %v1825
    %2081 = vmatpush1.bf16.msra.mxu0 %v1824
    %2082 = vmatprep.subr.bf16.mxu0 %v1827
    %2083 = vmatpush1.bf16.msra.mxu0 %v1826
    %2084 = vmatprep.subr.bf16.mxu0 %v1829
    %2085 = vmatpush1.bf16.msra.mxu0 %v1828
    %2086 = vmatprep.mubr.bf16.mxu0 %v1267
    %2087 = vmatmul.mubr.bf16.gmra.mrb[0].mxu0 %v1266
    %v2088 = vpop.f32.mrb[0].mxu0
    %v2089 = vadd.f32 %v1407, %v2088
    %v2090 = vpop.f32.mrb[0].mxu0
    %v2091 = vadd.f32 %v1411, %v2090
    %v2092 = vpop.f32.mrb[0].mxu0
    %v2093 = vpop.f32.mrb[0].mxu0
    %2094 = vdwg.mxu0
    %2095 = vmatprep.subr.bf16.mxu0 %v1831
    %2096 = vmatpush1.bf16.msra.mxu0 %v1830
    %2097 = vmatprep.subr.bf16.mxu0 %v1833
    %2098 = vmatpush1.bf16.msra.mxu0 %v1832
    %2099 = vmatprep.subr.bf16.mxu0 %v1835
    %2100 = vmatpush1.bf16.msra.mxu0 %v1834
    %2101 = vmatprep.subr.bf16.mxu0 %v1837
    %2102 = vmatpush1.bf16.msra.mxu0 %v1836
    %2103 = vmatprep.subr.bf16.mxu0 %v1839
    %2104 = vmatpush1.bf16.msra.mxu0 %v1838
    %2105 = vmatprep.subr.bf16.mxu0 %v1841
    %2106 = vmatpush1.bf16.msra.mxu0 %v1840
    %2107 = vmatprep.subr.bf16.mxu0 %v1843
    %2108 = vmatpush1.bf16.msra.mxu0 %v1842
    %2109 = vmatprep.subr.bf16.mxu0 %v1845
    %2110 = vmatpush1.bf16.msra.mxu0 %v1844
    %2111 = vmatprep.subr.bf16.mxu0 %v1847
    %2112 = vmatpush1.bf16.msra.mxu0 %v1846
    %2113 = vmatprep.subr.bf16.mxu0 %v1849
    %2114 = vmatpush1.bf16.msra.mxu0 %v1848
    %2115 = vmatprep.subr.bf16.mxu0 %v1851
    %2116 = vmatpush1.bf16.msra.mxu0 %v1850
    %2117 = vmatprep.subr.bf16.mxu0 %v1853
    %2118 = vmatpush1.bf16.msra.mxu0 %v1852
    %2119 = vmatprep.subr.bf16.mxu0 %v1855
    %2120 = vmatpush1.bf16.msra.mxu0 %v1854
    %2121 = vmatprep.subr.bf16.mxu0 %v1857
    %2122 = vmatpush1.bf16.msra.mxu0 %v1856
    %2123 = vmatprep.subr.bf16.mxu0 %v1859
    %2124 = vmatpush1.bf16.msra.mxu0 %v1858
    %2125 = vmatprep.subr.bf16.mxu0 %v1861
    %2126 = vmatpush1.bf16.msra.mxu0 %v1860
    %2127 = vmatprep.mubr.bf16.mxu0 %v1269
    %2128 = vmatmul.mubr.bf16.gmra.mrb[0].mxu0 %v1268
    %v2129 = vpop.f32.mrb[0].mxu0
    %v2130 = vadd.f32 %v2089, %v2129
    %v2131 = vpop.f32.mrb[0].mxu0
    %v2132 = vadd.f32 %v2091, %v2131
    %v2133 = vpop.f32.mrb[0].mxu0
    %v2134 = vpop.f32.mrb[0].mxu0
    %2135 = vdwg.mxu0
    %2136 = vmatprep.subr.bf16.mxu0 %v1863
    %2137 = vmatpush1.bf16.msra.mxu0 %v1862
    %2138 = vmatprep.subr.bf16.mxu0 %v1865
    %2139 = vmatpush1.bf16.msra.mxu0 %v1864
    %2140 = vmatprep.subr.bf16.mxu0 %v1867
    %2141 = vmatpush1.bf16.msra.mxu0 %v1866
    %2142 = vmatprep.subr.bf16.mxu0 %v1869
    %2143 = vmatpush1.bf16.msra.mxu0 %v1868
    %2144 = vmatprep.subr.bf16.mxu0 %v1871
    %2145 = vmatpush1.bf16.msra.mxu0 %v1870
    %2146 = vmatprep.subr.bf16.mxu0 %v1873
    %2147 = vmatpush1.bf16.msra.mxu0 %v1872
    %2148 = vmatprep.subr.bf16.mxu0 %v1875
    %2149 = vmatpush1.bf16.msra.mxu0 %v1874
    %2150 = vmatprep.subr.bf16.mxu0 %v1877
    %2151 = vmatpush1.bf16.msra.mxu0 %v1876
    %2152 = vmatprep.subr.bf16.mxu0 %v1879
    %2153 = vmatpush1.bf16.msra.mxu0 %v1878
    %2154 = vmatprep.subr.bf16.mxu0 %v1881
    %2155 = vmatpush1.bf16.msra.mxu0 %v1880
    %2156 = vmatprep.subr.bf16.mxu0 %v1883
    %2157 = vmatpush1.bf16.msra.mxu0 %v1882
    %2158 = vmatprep.subr.bf16.mxu0 %v1885
    %2159 = vmatpush1.bf16.msra.mxu0 %v1884
    %2160 = vmatprep.subr.bf16.mxu0 %v1887
    %2161 = vmatpush1.bf16.msra.mxu0 %v1886
    %2162 = vmatprep.subr.bf16.mxu0 %v1889
    %2163 = vmatpush1.bf16.msra.mxu0 %v1888
    %2164 = vmatprep.subr.bf16.mxu0 %v1891
    %2165 = vmatpush1.bf16.msra.mxu0 %v1890
    %2166 = vmatprep.subr.bf16.mxu0 %v1893
    %2167 = vmatpush1.bf16.msra.mxu0 %v1892
    %2168 = vmatprep.mubr.bf16.mxu0 %v1271
    %2169 = vmatmul.mubr.bf16.gmra.mrb[0].mxu0 %v1270
    %v2170 = vpop.f32.mrb[0].mxu0
    %v2171 = vadd.f32 %v2130, %v2170
    %v2172 = vpop.f32.mrb[0].mxu0
    %v2173 = vadd.f32 %v2132, %v2172
    %v2174 = vpop.f32.mrb[0].mxu0
    %v2175 = vpop.f32.mrb[0].mxu0
    %2176 = vdwg.mxu0
    %2177 = vmatprep.subr.bf16.mxu0 %v1895
    %2178 = vmatpush1.bf16.msra.mxu0 %v1894
    %2179 = vmatprep.subr.bf16.mxu0 %v1897
    %2180 = vmatpush1.bf16.msra.mxu0 %v1896
    %2181 = vmatprep.subr.bf16.mxu0 %v1899
    %2182 = vmatpush1.bf16.msra.mxu0 %v1898
    %2183 = vmatprep.subr.bf16.mxu0 %v1901
    %2184 = vmatpush1.bf16.msra.mxu0 %v1900
    %2185 = vmatprep.subr.bf16.mxu0 %v1903
    %2186 = vmatpush1.bf16.msra.mxu0 %v1902
    %2187 = vmatprep.subr.bf16.mxu0 %v1905
    %2188 = vmatpush1.bf16.msra.mxu0 %v1904
    %2189 = vmatprep.subr.bf16.mxu0 %v1907
    %2190 = vmatpush1.bf16.msra.mxu0 %v1906
    %2191 = vmatprep.subr.bf16.mxu0 %v1909
    %2192 = vmatpush1.bf16.msra.mxu0 %v1908
    %2193 = vmatprep.subr.bf16.mxu0 %v1911
    %2194 = vmatpush1.bf16.msra.mxu0 %v1910
    %2195 = vmatprep.subr.bf16.mxu0 %v1913
    %2196 = vmatpush1.bf16.msra.mxu0 %v1912
    %2197 = vmatprep.subr.bf16.mxu0 %v1915
    %2198 = vmatpush1.bf16.msra.mxu0 %v1914
    %2199 = vmatprep.subr.bf16.mxu0 %v1917
    %2200 = vmatpush1.bf16.msra.mxu0 %v1916
    %2201 = vmatprep.subr.bf16.mxu0 %v1919
    %2202 = vmatpush1.bf16.msra.mxu0 %v1918
    %2203 = vmatprep.subr.bf16.mxu0 %v1921
    %2204 = vmatpush1.bf16.msra.mxu0 %v1920
    %2205 = vmatprep.subr.bf16.mxu0 %v1923
    %2206 = vmatpush1.bf16.msra.mxu0 %v1922
    %2207 = vmatprep.subr.bf16.mxu0 %v1925
    %2208 = vmatpush1.bf16.msra.mxu0 %v1924
    %2209 = vmatprep.mubr.bf16.mxu0 %v1273
    %2210 = vmatmul.mubr.bf16.gmra.mrb[0].mxu0 %v1272
    %v2211 = vpop.f32.mrb[0].mxu0
    %v2212 = vadd.f32 %v2171, %v2211
    %v2213 = vpop.f32.mrb[0].mxu0
    %v2214 = vadd.f32 %v2173, %v2213
    %v2215 = vpop.f32.mrb[0].mxu0
    %v2216 = vpop.f32.mrb[0].mxu0
    %2217 = vdwg.mxu0
    %v2218 = vmax.f32 %v2212, 0.0
    %v2219 = vmax.f32 %v2214, 0.0
    %v2220 = vpack.c.bf16 %v2218, %v2218
    %v2221 = vpack.c.bf16 %v2219, %v2219
    %v2222 = vld [vmem:[%s4] sm:$0xf]
    %v2223 = vld [vmem:[%s4 + $0x4] sm:$0xf]
    %v2224 = vld [vmem:[%s4 + $0x8] sm:$0xf]
    %v2225 = vld [vmem:[%s4 + $0xc] sm:$0xf]
    %v2226 = vld [vmem:[%s4 + $0x10] sm:$0xf]
    %v2227 = vld [vmem:[%s4 + $0x14] sm:$0xf]
    %v2228 = vld [vmem:[%s4 + $0x18] sm:$0xf]
    %v2229 = vld [vmem:[%s4 + $0x1c] sm:$0xf]
    %v2230 = vld [vmem:[%s4 + $0x20] sm:$0xf]
    %v2231 = vld [vmem:[%s4 + $0x24] sm:$0xf]
    %v2232 = vld [vmem:[%s4 + $0x28] sm:$0xf]
    %v2233 = vld [vmem:[%s4 + $0x2c] sm:$0xf]
    %v2234 = vld [vmem:[%s4 + $0x30] sm:$0xf]
    %v2235 = vld [vmem:[%s4 + $0x34] sm:$0xf]
    %v2236 = vld [vmem:[%s4 + $0x38] sm:$0xf]
    %v2237 = vld [vmem:[%s4 + $0x3c] sm:$0xf]
    %v2238 = vld [vmem:[%s4 + $0x40] sm:$0xf]
    %v2239 = vld [vmem:[%s4 + $0x44] sm:$0xf]
    %v2240 = vld [vmem:[%s4 + $0x48] sm:$0xf]
    %v2241 = vld [vmem:[%s4 + $0x4c] sm:$0xf]
    %v2242 = vld [vmem:[%s4 + $0x50] sm:$0xf]
    %v2243 = vld [vmem:[%s4 + $0x54] sm:$0xf]
    %v2244 = vld [vmem:[%s4 + $0x58] sm:$0xf]
    %v2245 = vld [vmem:[%s4 + $0x5c] sm:$0xf]
    %v2246 = vld [vmem:[%s4 + $0x60] sm:$0xf]
    %v2247 = vld [vmem:[%s4 + $0x64] sm:$0xf]
    %v2248 = vld [vmem:[%s4 + $0x68] sm:$0xf]
    %v2249 = vld [vmem:[%s4 + $0x6c] sm:$0xf]
    %v2250 = vld [vmem:[%s4 + $0x70] sm:$0xf]
    %v2251 = vld [vmem:[%s4 + $0x74] sm:$0xf]
    %v2252 = vld [vmem:[%s4 + $0x78] sm:$0xf]
    %v2253 = vld [vmem:[%s4 + $0x7c] sm:$0xf]
    %v2254 = vld [vmem:[%s5] sm:$0x1]
    %v2256 = vlaneseq
    %v2257 = vshrl.u32 %v2256, 7
    %v2258 = vsub.s32 0, %v2257
    %v2259 = vrot.slane %v2254, %v2258
    %v2293 = vunpack.c.l.b16 %v2222
    %v2294 = vunpack.c.l.b16 %v2223
    %v2295 = vunpack.c.l.b16 %v2224
    %v2296 = vunpack.c.l.b16 %v2225
    %v2297 = vunpack.c.l.b16 %v2226
    %v2298 = vunpack.c.l.b16 %v2227
    %v2299 = vunpack.c.l.b16 %v2228
    %v2300 = vunpack.c.l.b16 %v2229
    %v2301 = vunpack.c.l.b16 %v2230
    %v2302 = vunpack.c.l.b16 %v2231
    %v2303 = vunpack.c.l.b16 %v2232
    %v2304 = vunpack.c.l.b16 %v2233
    %v2305 = vunpack.c.l.b16 %v2234
    %v2306 = vunpack.c.l.b16 %v2235
    %v2307 = vunpack.c.l.b16 %v2236
    %v2308 = vunpack.c.l.b16 %v2237
    %v2309 = vunpack.c.l.b16 %v2238
    %v2310 = vunpack.c.l.b16 %v2239
    %v2311 = vunpack.c.l.b16 %v2240
    %v2312 = vunpack.c.l.b16 %v2241
    %v2313 = vunpack.c.l.b16 %v2242
    %v2314 = vunpack.c.l.b16 %v2243
    %v2315 = vunpack.c.l.b16 %v2244
    %v2316 = vunpack.c.l.b16 %v2245
    %v2317 = vunpack.c.l.b16 %v2246
    %v2318 = vunpack.c.l.b16 %v2247
    %v2319 = vunpack.c.l.b16 %v2248
    %v2320 = vunpack.c.l.b16 %v2249
    %v2321 = vunpack.c.l.b16 %v2250
    %v2322 = vunpack.c.l.b16 %v2251
    %v2323 = vunpack.c.l.b16 %v2252
    %v2324 = vunpack.c.l.b16 %v2253
    %v2325 = vpack.c.b16 %v2294, %v2293
    %v2326 = vpack.c.b16 %v2296, %v2295
    %v2327 = vpack.c.b16 %v2298, %v2297
    %v2328 = vpack.c.b16 %v2300, %v2299
    %v2329 = vpack.c.b16 %v2302, %v2301
    %v2330 = vpack.c.b16 %v2304, %v2303
    %v2331 = vpack.c.b16 %v2306, %v2305
    %v2332 = vpack.c.b16 %v2308, %v2307
    %v2333 = vpack.c.b16 %v2310, %v2309
    %v2334 = vpack.c.b16 %v2312, %v2311
    %v2335 = vpack.c.b16 %v2314, %v2313
    %v2336 = vpack.c.b16 %v2316, %v2315
    %v2337 = vpack.c.b16 %v2318, %v2317
    %v2338 = vpack.c.b16 %v2320, %v2319
    %v2339 = vpack.c.b16 %v2322, %v2321
    %v2340 = vpack.c.b16 %v2324, %v2323
    %2357 = vmatprep.subr.bf16.mxu0 0
    %2358 = vmatpush1.bf16.msra.mxu0 %v2325
    %2359 = vmatprep.subr.bf16.mxu0 0
    %2360 = vmatpush1.bf16.msra.mxu0 %v2326
    %2361 = vmatprep.subr.bf16.mxu0 0
    %2362 = vmatpush1.bf16.msra.mxu0 %v2327
    %2363 = vmatprep.subr.bf16.mxu0 0
    %2364 = vmatpush1.bf16.msra.mxu0 %v2328
    %2365 = vmatprep.subr.bf16.mxu0 0
    %2366 = vmatpush1.bf16.msra.mxu0 %v2329
    %2367 = vmatprep.subr.bf16.mxu0 0
    %2368 = vmatpush1.bf16.msra.mxu0 %v2330
    %2369 = vmatprep.subr.bf16.mxu0 0
    %2370 = vmatpush1.bf16.msra.mxu0 %v2331
    %2371 = vmatprep.subr.bf16.mxu0 0
    %2372 = vmatpush1.bf16.msra.mxu0 %v2332
    %2373 = vmatprep.subr.bf16.mxu0 0
    %2374 = vmatpush1.bf16.msra.mxu0 %v2333
    %2375 = vmatprep.subr.bf16.mxu0 0
    %2376 = vmatpush1.bf16.msra.mxu0 %v2334
    %2377 = vmatprep.subr.bf16.mxu0 0
    %2378 = vmatpush1.bf16.msra.mxu0 %v2335
    %2379 = vmatprep.subr.bf16.mxu0 0
    %2380 = vmatpush1.bf16.msra.mxu0 %v2336
    %2381 = vmatprep.subr.bf16.mxu0 0
    %2382 = vmatpush1.bf16.msra.mxu0 %v2337
    %2383 = vmatprep.subr.bf16.mxu0 0
    %2384 = vmatpush1.bf16.msra.mxu0 %v2338
    %2385 = vmatprep.subr.bf16.mxu0 0
    %2386 = vmatpush1.bf16.msra.mxu0 %v2339
    %2387 = vmatprep.subr.bf16.mxu0 0
    %2388 = vmatpush1.bf16.msra.mxu0 %v2340
    %2389 = vmatprep.mubr.bf16.mxu0 %v2221
    %2390 = vmatmul.mubr.bf16.gmra.mrb[0].mxu0 %v2220
    %v2391 = vpop.f32.mrb[0].mxu0
    %v2392 = vadd.f32 %v2259, %v2391
    %v2393 = vpop.f32.mrb[0].mxu0
    %v2394 = vpop.f32.mrb[0].mxu0
    %v2395 = vpop.f32.mrb[0].mxu0
    %2396 = vdwg.mxu0
    %2397 = vst [vmem:[#allocation6] sm:$0x3] %v2392
    // Predicated region
    $region30: #{siamese_forward.1} parent=1 // pred_check
      _
    $region31: #{siamese_forward.1} parent=1 // pred_check_branch
      %2399 = sbr.rel (0) target = $region33
    $region32: #{siamese_forward.1} parent=1 // pred_region
      %s2401 = ssub.s32 32, 32
      %2402 = vsyncadd [#allocation4], %s2401
      %s2404 = sshll.u32 [#allocation5], 4
      %s2405 = int_to_ptr.vmem [resolvable:$true] %s2404
      %2407 = dma.vmem_to_hbm [thread:$0]  %s2405, 32, %s6, [#allocation4]
    $region33: #{siamese_forward.1} parent=1 // pred_fallthru
      _
    // Predicated region
    $region34: #{siamese_forward.1} parent=1 // pred_check
      _
    $region35: #{siamese_forward.1} parent=1 // pred_check_branch
      %2409 = sbr.rel (0) target = $region37
    $region36: #{siamese_forward.1} parent=1 // pred_region
      %s2411 = ssub.s32 32, 32
      %2412 = vsyncadd [#allocation7], %s2411
      %s2414 = sshll.u32 [#allocation6], 4
      %s2415 = int_to_ptr.vmem [resolvable:$true] %s2414
      %2417 = dma.vmem_to_hbm [thread:$0]  %s2415, 32, %s7, [#allocation7]
    $region37: #{siamese_forward.1} parent=1 // pred_fallthru
      _
    // Predicated region
    $region38: #{siamese_forward.1} parent=1 // pred_check
      _
    $region39: #{siamese_forward.1} parent=1 // pred_check_branch
      %2419 = sbr.rel (0) target = $region41
    $region40: #{siamese_forward.1} parent=1 // pred_region
      %2420 = dma.done [#allocation4], 32
    $region41: #{siamese_forward.1} parent=1 // pred_fallthru
      _
    // Predicated region
    $region42: #{siamese_forward.1} parent=1 // pred_check
      _
    $region43: #{siamese_forward.1} parent=1 // pred_check_branch
      %2422 = sbr.rel (0) target = $region45
    $region44: #{siamese_forward.1} parent=1 // pred_region
      %2423 = dma.done [#allocation7], 32
    $region45: #{siamese_forward.1} parent=1 // pred_fallthru
      _
    %2424 = vsyncpa [#allocation3], 1
    %2425 = vsyncpa [#allocation4], 1
    %2426 = vsyncpa [#allocation7], 1

</llo_original>
